<compile_context>
chip_gen: v5e
topology: v5e:2x2
jax: 0.10.0
libtpu: 0.0.40
codegen_flags: <defaults>
</compile_context>

<pallas_src>
import functools

import jax
import jax.numpy as jnp
from jax.experimental import pallas as pl
from jax.experimental.pallas import tpu as pltpu


def _baseline_transformer_kernel(
    x_ref,                       # (M, C)  f32, M = b_blk * T
    wenc_ref, benc_ref,          # (C, K) bf16, (1, K) f32
    pos_ref,                     # (T, K) f32
    wqkv_ref,                    # (1, K, 3Hk) bf16  (q heads | k heads | v heads)
    wu_ref, bu_ref,              # (1, Hk, K) bf16, (1, 1, K) f32
    ln1g_ref, ln1b_ref,          # (1, 1, K) f32
    wf1_ref, bf1_ref,            # (1, K, 4K) bf16, (1, 1, 4K) f32
    wf2_ref, bf2_ref,            # (1, 4K, K) bf16, (1, 1, K) f32
    ln2g_ref, ln2b_ref,          # (1, 1, K) f32
    wout_ref,                    # (1, K) f32
    bout_ref,                    # (1, 1) f32 in SMEM
    out_ref,                     # (1, b_blk, T) f32
    h_ref,                       # VMEM scratch (M, K) f32, carried across depth steps
    *, b_blk, seq, heads, k, eps=1e-5,
):
    T = seq
    M = b_blk * T
    Hk = heads * k
    f32 = jnp.float32
    bf16 = jnp.bfloat16
    d = pl.program_id(1)

    # ---- layer 0 prologue: init_encoder + positional embedding ----
    @pl.when(d == 0)
    def _():
        x = x_ref[...]
        # TODO(synk): when in_channels << 128, replace this 4-deep MXU
        # contraction with C VPU broadcast-multiply-adds.
        h0 = jnp.dot(x.astype(bf16), wenc_ref[...], preferred_element_type=f32)
        h0 = h0 + benc_ref[...]
        # broadcast positional-embedding add (no jnp.tile temp)
        h0 = (h0.reshape(b_blk, T, k) + pos_ref[...][None]).reshape(M, k)
        h_ref[...] = h0

    def layer_norm(v, g, b):
        mu = jnp.mean(v, axis=-1, keepdims=True)
        var = jnp.mean((v - mu) ** 2, axis=-1, keepdims=True)
        return (v - mu) * jax.lax.rsqrt(var + eps) * g + b

    h = h_ref[...]                                            # (M, K) f32

    # ---------------- self attention ----------------
    h16 = h.astype(bf16)
    # one wide lane-dense QKV projection; q/k scaling folded into weights.
    qkv = jnp.dot(h16, wqkv_ref[0], preferred_element_type=f32).astype(bf16)  # (M, 3Hk)

    o_heads = []
    for hd in range(heads):                                   # small static loop
        ql = qkv[:, hd * k:(hd + 1) * k].reshape(b_blk, T, k)
        kl = qkv[:, Hk + hd * k:Hk + (hd + 1) * k].reshape(b_blk, T, k)
        vl = qkv[:, 2 * Hk + hd * k:2 * Hk + (hd + 1) * k].reshape(b_blk, T, k)
        s = jnp.einsum("bqd,bkd->bqk", ql, kl,
                       preferred_element_type=f32)            # (b_blk, T, T)
        s = s - jnp.max(s, axis=-1, keepdims=True)
        e = jnp.exp(s)
        p = e * pl.reciprocal(jnp.sum(e, axis=-1, keepdims=True), approx=True)
        o = jnp.einsum("bqk,bkd->bqd", p.astype(bf16), vl,
                       preferred_element_type=f32)            # (b_blk, T, k)
        o_heads.append(o.reshape(M, k))
    o_cat = (o_heads[0] if heads == 1
             else jnp.concatenate(o_heads, axis=-1)).astype(bf16)   # (M, Hk)
    # fused unify: single matmul with contraction dim Hk
    att = jnp.dot(o_cat, wu_ref[0], preferred_element_type=f32) + bu_ref[0]
    h = layer_norm(att + h, ln1g_ref[0], ln1b_ref[0])

    # ---------------- feed forward ----------------
    h16 = h.astype(bf16)
    ff = jnp.dot(h16, wf1_ref[0], preferred_element_type=f32) + bf1_ref[0]
    ff = jnp.maximum(ff, 0.0)
    ff = jnp.dot(ff.astype(bf16), wf2_ref[0], preferred_element_type=f32) + bf2_ref[0]
    h = layer_norm(ff + h, ln2g_ref[0], ln2b_ref[0])

    h_ref[...] = h                                            # carry to next depth step

    # ---- last layer epilogue: to_logits (lane reduce) + sigmoid ('loc') ----
    @pl.when(d == pl.num_programs(1) - 1)
    def _():
        h3 = h.reshape(b_blk, T, k)
        logits = jnp.sum(h3 * wout_ref[...], axis=-1) + bout_ref[0, 0]   # (b_blk, T)
        out_ref[0] = jax.nn.sigmoid(logits)


def _choose_b_blk(batch, seq, target_rows=512):
    """How many batch elements are folded per grid step.

    Prefers taller per-step matmuls (M = b_blk * seq rows), keeps the number of
    batch grid steps EVEN when possible (v7x shards the 'parallel' axis across
    its 2 TensorCores), and keeps M sublane-aligned when the grid has >1 step.
    """
    divs = [d for d in range(1, batch + 1) if batch % d == 0]
    cap = max(1, target_rows // max(seq, 1))

    def fits(d):
        nb = batch // d
        return d <= cap and (nb == 1 or (d * seq) % 8 == 0)

    cands = [d for d in divs if fits(d)]
    if not cands:
        return batch                      # single step: block == full array, always legal
    even = [d for d in cands if (batch // d) % 2 == 0]
    pool = even if even else cands
    return max(pool)


def baseline_transformer_pallas(x_bct, params, *, depth, heads, k, b_blk=None):
    """x_bct: [B, C, T] float32 (PyTorch layout).  Returns 'loc' of shape [B, T]."""
    x_btc = jnp.transpose(x_bct, (0, 2, 1)).astype(jnp.float32)   # glue: [B, T, C]
    B, T, C = x_btc.shape
    Hk = heads * k
    F = 4 * k
    D = depth
    if b_blk is None:
        b_blk = _choose_b_blk(B, T)
    assert B % b_blk == 0
    nb = B // b_blk
    M = b_blk * T
    scale = 1.0 / (k ** 0.25)

    # ---- host-side weight layout glue (free): lane-dense fused QKV ----
    wqkv = jnp.concatenate(
        [params["wq"] * scale, params["wk"] * scale, params["wv"]],
        axis=-1).astype(jnp.bfloat16)                          # (D, K, 3Hk)
    wu = params["wu"].astype(jnp.bfloat16)                     # (D, Hk, K)
    wenc = params["wenc"].astype(jnp.bfloat16)
    wf1 = params["wf1"].astype(jnp.bfloat16)
    wf2 = params["wf2"].astype(jnp.bfloat16)
    wout = params["wout"].reshape(1, k).astype(jnp.float32)

    x2d = x_btc.reshape(B * T, C)            # batch folded into rows

    def const_spec(shape):                   # grid-invariant tensors
        return pl.BlockSpec(shape, lambda b, d, _s=len(shape): (0,) * _s)

    def layer_spec(shape):                   # per-layer weights, streamed over depth
        return pl.BlockSpec((1,) + shape,
                            lambda b, d, _s=len(shape): (d,) + (0,) * _s)

    kern = functools.partial(_baseline_transformer_kernel,
                             b_blk=b_blk, seq=T, heads=heads, k=k)

    out = pl.pallas_call(
        kern,
        out_shape=jax.ShapeDtypeStruct((nb, b_blk, T), jnp.float32),
        grid=(nb, depth),
        in_specs=[
            pl.BlockSpec((M, C), lambda b, d: (b, 0)),          # x rows
            const_spec((C, k)), const_spec((1, k)),             # init encoder
            const_spec((T, k)),                                 # pos emb
            layer_spec((k, 3 * Hk)),                            # fused QKV weights
            layer_spec((Hk, k)), layer_spec((1, k)),            # unify heads
            layer_spec((1, k)), layer_spec((1, k)),             # ln1 gamma/beta
            layer_spec((k, F)), layer_spec((1, F)),             # ff1
            layer_spec((F, k)), layer_spec((1, k)),             # ff2
            layer_spec((1, k)), layer_spec((1, k)),             # ln2 gamma/beta
            const_spec((1, k)),                                 # to_logits weight
            pl.BlockSpec(memory_space=pltpu.MemorySpace.SMEM),  # to_logits bias
        ],
        out_specs=pl.BlockSpec((1, b_blk, T), lambda b, d: (b, 0, 0)),
        scratch_shapes=[pltpu.VMEM((M, k), jnp.float32)],       # activation carry
        compiler_params=pltpu.CompilerParams(
            dimension_semantics=("parallel", "arbitrary"),
            vmem_limit_bytes=64 * 1024 * 1024),
    )(
        x2d,
        wenc, params["benc"], params["pos"],
        wqkv, wu, params["bu"],
        params["ln1g"], params["ln1b"],
        wf1, params["bf1"], wf2, params["bf2"],
        params["ln2g"], params["ln2b"],
        wout, params["bout"],
    )
    return out.reshape(B, T)                 # matches PyTorch .view(b, -1)


def make_params(key, *, in_channels, k, heads, depth, seq_length):
    HK = heads * k
    F = 4 * k
    ks = jax.random.split(key, 16)
    n = lambda kk, shape, s=0.05: (jax.random.normal(kk, shape, jnp.float32) * s)
    return dict(
        wenc=n(ks[0], (in_channels, k)),
        benc=n(ks[1], (1, k)),
        pos=n(ks[2], (seq_length, k)),
        wq=n(ks[3], (depth, k, HK)),
        wk=n(ks[4], (depth, k, HK)),
        wv=n(ks[5], (depth, k, HK)),
        wu=n(ks[6], (depth, HK, k)),
        bu=n(ks[7], (depth, 1, k)),
        ln1g=jnp.ones((depth, 1, k), jnp.float32),
        ln1b=jnp.zeros((depth, 1, k), jnp.float32),
        wf1=n(ks[8], (depth, k, F)),
        bf1=n(ks[9], (depth, 1, F)),
        wf2=n(ks[10], (depth, F, k)),
        bf2=n(ks[11], (depth, 1, k)),
        ln2g=jnp.ones((depth, 1, k), jnp.float32),
        ln2b=jnp.zeros((depth, 1, k), jnp.float32),
        wout=n(ks[12], (k, 1)),
        bout=n(ks[13], (1, 1)),
    )


def reference_forward(x_bct, p, *, depth, heads, k, eps=1e-5):
    """Pure-JAX f32 reference replicating the PyTorch forward (loc output)."""
    x = jnp.transpose(x_bct, (0, 2, 1))
    h = x @ p["wenc"] + p["benc"]
    h = h + p["pos"][None]
    scale = 1.0 / (k ** 0.25)

    def ln(v, g, b):
        mu = jnp.mean(v, -1, keepdims=True)
        var = jnp.mean((v - mu) ** 2, -1, keepdims=True)
        return (v - mu) * jax.lax.rsqrt(var + eps) * g + b

    B, T, _ = h.shape
    for d in range(depth):
        q = (h @ p["wq"][d]).reshape(B, T, heads, k) * scale
        kk = (h @ p["wk"][d]).reshape(B, T, heads, k) * scale
        v = (h @ p["wv"][d]).reshape(B, T, heads, k)
        s = jnp.einsum("bthk,bshk->bhts", q, kk)
        a = jax.nn.softmax(s, axis=-1)
        o = jnp.einsum("bhts,bshk->bthk", a, v).reshape(B, T, heads * k)
        o = o @ p["wu"][d] + p["bu"][d]
        h = ln(o + h, p["ln1g"][d], p["ln1b"][d])
        f = jnp.maximum(h @ p["wf1"][d] + p["bf1"][d], 0.0) @ p["wf2"][d] + p["bf2"][d]
        h = ln(f + h, p["ln2g"][d], p["ln2b"][d])
    logits = h @ p["wout"] + p["bout"]
    return jax.nn.sigmoid(logits).reshape(B, -1)


if __name__ == "__main__":
    B, C, T = 2, 4, 8          # batch, in_channels, seq_length
    K, H, DEPTH = 32, 4, 2     # embed dim k, heads, depth (small config)

    key = jax.random.PRNGKey(0)
    kx, kp = jax.random.split(key)
    x = jax.random.normal(kx, (B, C, T), jnp.float32)   # PyTorch layout [B, C, T]
    params = make_params(kp, in_channels=C, k=K, heads=H, depth=DEPTH, seq_length=T)

    out = baseline_transformer_pallas(x, params, depth=DEPTH, heads=H, k=K)
    out = jax.block_until_ready(out)

    ref = reference_forward(x, params, depth=DEPTH, heads=H, k=K)
    assert out.shape == (B, T)
    # bf16 MXU operands (f32 accumulation) + approx softmax reciprocal -> loose tol.
    assert jnp.allclose(out, ref, rtol=2e-2, atol=2e-2), "mismatch vs reference"

    print("KERNEL_OK")
</pallas_src>

<mosaic_0001>
module attributes {stable_mosaic.version = 11 : i64} {
  func.func @_baseline_transformer_kernel(%arg0: i32, %arg1: i32, %arg2: memref<8x4xf32, #tpu.memory_space<vmem>>, %arg3: memref<4x32xbf16, #tpu.memory_space<vmem>>, %arg4: memref<1x32xf32, #tpu.memory_space<vmem>>, %arg5: memref<8x32xf32, #tpu.memory_space<vmem>>, %arg6: memref<1x32x384xbf16, #tpu.memory_space<vmem>>, %arg7: memref<1x128x32xbf16, #tpu.memory_space<vmem>>, %arg8: memref<1x1x32xf32, #tpu.memory_space<vmem>>, %arg9: memref<1x1x32xf32, #tpu.memory_space<vmem>>, %arg10: memref<1x1x32xf32, #tpu.memory_space<vmem>>, %arg11: memref<1x32x128xbf16, #tpu.memory_space<vmem>>, %arg12: memref<1x1x128xf32, #tpu.memory_space<vmem>>, %arg13: memref<1x128x32xbf16, #tpu.memory_space<vmem>>, %arg14: memref<1x1x32xf32, #tpu.memory_space<vmem>>, %arg15: memref<1x1x32xf32, #tpu.memory_space<vmem>>, %arg16: memref<1x1x32xf32, #tpu.memory_space<vmem>>, %arg17: memref<1x32xf32, #tpu.memory_space<vmem>>, %arg18: memref<1x1xf32, #tpu.memory_space<smem>>, %arg19: memref<1x1x8xf32, #tpu.memory_space<vmem>>, %arg20: memref<8x32xf32, #tpu.memory_space<vmem>>) attributes {dimension_semantics = [#tpu.dimension_semantics<parallel>, #tpu.dimension_semantics<arbitrary>], iteration_bounds = array<i64: 2, 2>, scalar_prefetch = 0 : i64, scratch_operands = 1 : i64, tpu.core_type = #tpu.core_type<tc>, window_params = [{transform_indices = @transform_0, window_bounds = array<i64: 8, 4>}, {pipeline_mode = #tpu.pipeline_mode<synchronous>, transform_indices = @transform_1, window_bounds = array<i64: 4, 32>}, {pipeline_mode = #tpu.pipeline_mode<synchronous>, transform_indices = @transform_2, window_bounds = array<i64: 1, 32>}, {pipeline_mode = #tpu.pipeline_mode<synchronous>, transform_indices = @transform_3, window_bounds = array<i64: 8, 32>}, {transform_indices = @transform_4, window_bounds = array<i64: 1, 32, 384>}, {transform_indices = @transform_5, window_bounds = array<i64: 1, 128, 32>}, {transform_indices = @transform_6, window_bounds = array<i64: 1, 1, 32>}, {transform_indices = @transform_7, window_bounds = array<i64: 1, 1, 32>}, {transform_indices = @transform_8, window_bounds = array<i64: 1, 1, 32>}, {transform_indices = @transform_9, window_bounds = array<i64: 1, 32, 128>}, {transform_indices = @transform_10, window_bounds = array<i64: 1, 1, 128>}, {transform_indices = @transform_11, window_bounds = array<i64: 1, 128, 32>}, {transform_indices = @transform_12, window_bounds = array<i64: 1, 1, 32>}, {transform_indices = @transform_13, window_bounds = array<i64: 1, 1, 32>}, {transform_indices = @transform_14, window_bounds = array<i64: 1, 1, 32>}, {pipeline_mode = #tpu.pipeline_mode<synchronous>, transform_indices = @transform_15, window_bounds = array<i64: 1, 32>}, {transform_indices = @transform_16, window_bounds = array<i64: 1, 1>}, {transform_indices = @transform_17, window_bounds = array<i64: 1, 1, 8>}]} {
    %c0_i32 = arith.constant 0 : i32
    %0 = arith.cmpi eq, %arg1, %c0_i32 : i32
    %1 = arith.extui %0 : i1 to i32
    %c0_i32_0 = arith.constant 0 : i32
    %2 = arith.cmpi ne, %1, %c0_i32_0 : i32
    scf.if %2 {
      %c0_68 = arith.constant 0 : index
      %c0_69 = arith.constant 0 : index
      %174 = vector.load %arg2[%c0_68, %c0_69] : memref<8x4xf32, #tpu.memory_space<vmem>>, vector<8x4xf32>
      %175 = arith.truncf %174 : vector<8x4xf32> to vector<8x4xbf16>
      %c0_70 = arith.constant 0 : index
      %c0_71 = arith.constant 0 : index
      %176 = vector.load %arg3[%c0_70, %c0_71] : memref<4x32xbf16, #tpu.memory_space<vmem>>, vector<4x32xbf16>
      %cst_72 = arith.constant dense<0.000000e+00> : vector<8x32xf32>
      %177 = tpu.matmul %175, %176, %cst_72 {dimension_numbers = #tpu.dot_dimension_numbers<[1], [0], [0], [1], [0, 0, 1, 1], [], []>} : vector<8x4xbf16>, vector<4x32xbf16>, vector<8x32xf32> -> vector<8x32xf32>
      %c0_73 = arith.constant 0 : index
      %c0_74 = arith.constant 0 : index
      %178 = vector.load %arg4[%c0_73, %c0_74] : memref<1x32xf32, #tpu.memory_space<vmem>>, vector<1x32xf32>
      %179 = vector.broadcast %178 : vector<1x32xf32> to vector<8x32xf32>
      %180 = arith.addf %177, %179 : vector<8x32xf32>
      %181 = vector.shape_cast %180 : vector<8x32xf32> to vector<1x8x32xf32>
      %c0_75 = arith.constant 0 : index
      %c0_76 = arith.constant 0 : index
      %182 = vector.load %arg5[%c0_75, %c0_76] : memref<8x32xf32, #tpu.memory_space<vmem>>, vector<8x32xf32>
      %183 = vector.shape_cast %182 : vector<8x32xf32> to vector<1x8x32xf32>
      %184 = arith.addf %181, %183 : vector<1x8x32xf32>
      %185 = vector.shape_cast %184 : vector<1x8x32xf32> to vector<8x32xf32>
      %c0_77 = arith.constant 0 : index
      %c0_78 = arith.constant 0 : index
      %186 = vector.load %arg20[%c0_77, %c0_78] : memref<8x32xf32, #tpu.memory_space<vmem>>, vector<8x32xf32>
      tpu.vector_store %arg20[%c0_77, %c0_78], %185 {strides = array<i32>} : memref<8x32xf32, #tpu.memory_space<vmem>>, vector<8x32xf32>,
    } else {
    }
    %c0 = arith.constant 0 : index
    %c0_1 = arith.constant 0 : index
    %3 = vector.load %arg20[%c0, %c0_1] : memref<8x32xf32, #tpu.memory_space<vmem>>, vector<8x32xf32>
    %4 = arith.truncf %3 : vector<8x32xf32> to vector<8x32xbf16>
    %c0_2 = arith.constant 0 : index
    %c0_3 = arith.constant 0 : index
    %c0_4 = arith.constant 0 : index
    %5 = vector.load %arg6[%c0_2, %c0_3, %c0_4] : memref<1x32x384xbf16, #tpu.memory_space<vmem>>, vector<1x32x384xbf16>
    %6 = vector.shape_cast %5 : vector<1x32x384xbf16> to vector<32x384xbf16>
    %cst = arith.constant dense<0.000000e+00> : vector<8x384xf32>
    %7 = tpu.matmul %4, %6, %cst {dimension_numbers = #tpu.dot_dimension_numbers<[1], [0], [0], [1], [0, 0, 1, 1], [], []>} : vector<8x32xbf16>, vector<32x384xbf16>, vector<8x384xf32> -> vector<8x384xf32>
    %8 = arith.truncf %7 : vector<8x384xf32> to vector<8x384xbf16>
    %9 = vector.extract_strided_slice %8 {offsets = [0, 0], sizes = [8, 32], strides = [1, 1]} : vector<8x384xbf16> to vector<8x32xbf16>
    %10 = vector.shape_cast %9 : vector<8x32xbf16> to vector<1x8x32xbf16>
    %11 = vector.extract_strided_slice %8 {offsets = [0, 128], sizes = [8, 32], strides = [1, 1]} : vector<8x384xbf16> to vector<8x32xbf16>
    %12 = vector.shape_cast %11 : vector<8x32xbf16> to vector<1x8x32xbf16>
    %13 = vector.extract_strided_slice %8 {offsets = [0, 256], sizes = [8, 32], strides = [1, 1]} : vector<8x384xbf16> to vector<8x32xbf16>
    %14 = vector.shape_cast %13 : vector<8x32xbf16> to vector<1x8x32xbf16>
    "tpu.trace_start"() <{level = 10 : i32, message = "bqd,bkd->bqk"}> : () -> ()
    %cst_5 = arith.constant dense<0.000000e+00> : vector<1x8x8xf32>
    %15 = tpu.matmul %10, %12, %cst_5 {dimension_numbers = #tpu.dot_dimension_numbers<[2], [2], [1], [1], [0, 0, 0, 1, 1, 1], [0], [0]>} : vector<1x8x32xbf16>, vector<1x8x32xbf16>, vector<1x8x8xf32> -> vector<1x8x8xf32>
    "tpu.trace_stop"() : () -> ()
    %cst_6 = arith.constant dense<0xFF800000> : vector<1x8xf32>
    %16 = vector.multi_reduction <maximumf>, %15, %cst_6 [2] : vector<1x8x8xf32> to vector<1x8xf32>
    %17 = vector.shape_cast %16 : vector<1x8xf32> to vector<1x8x1xf32>
    %18 = vector.broadcast %17 : vector<1x8x1xf32> to vector<1x8x8xf32>
    %19 = arith.subf %15, %18 : vector<1x8x8xf32>
    %20 = math.exp %19 : vector<1x8x8xf32>
    %cst_7 = arith.constant dense<0.000000e+00> : vector<1x8xf32>
    %21 = vector.multi_reduction <add>, %20, %cst_7 [2] : vector<1x8x8xf32> to vector<1x8xf32>
    %22 = vector.shape_cast %21 : vector<1x8xf32> to vector<1x8x1xf32>
    %23 = tpu.reciprocal %22 {approx = true} : vector<1x8x1xf32> -> vector<1x8x1xf32>
    %24 = vector.broadcast %23 : vector<1x8x1xf32> to vector<1x8x8xf32>
    %25 = arith.mulf %20, %24 : vector<1x8x8xf32>
    %26 = arith.truncf %25 : vector<1x8x8xf32> to vector<1x8x8xbf16>
    "tpu.trace_start"() <{level = 10 : i32, message = "bqk,bkd->bqd"}> : () -> ()
    %cst_8 = arith.constant dense<0.000000e+00> : vector<1x8x32xf32>
    %27 = tpu.matmul %26, %14, %cst_8 {dimension_numbers = #tpu.dot_dimension_numbers<[2], [1], [1], [2], [0, 0, 0, 1, 1, 2], [0], [0]>} : vector<1x8x8xbf16>, vector<1x8x32xbf16>, vector<1x8x32xf32> -> vector<1x8x32xf32>
    "tpu.trace_stop"() : () -> ()
    %28 = vector.shape_cast %27 : vector<1x8x32xf32> to vector<8x32xf32>
    %29 = vector.extract_strided_slice %8 {offsets = [0, 32], sizes = [8, 32], strides = [1, 1]} : vector<8x384xbf16> to vector<8x32xbf16>
    %30 = vector.shape_cast %29 : vector<8x32xbf16> to vector<1x8x32xbf16>
    %31 = vector.extract_strided_slice %8 {offsets = [0, 160], sizes = [8, 32], strides = [1, 1]} : vector<8x384xbf16> to vector<8x32xbf16>
    %32 = vector.shape_cast %31 : vector<8x32xbf16> to vector<1x8x32xbf16>
    %33 = vector.extract_strided_slice %8 {offsets = [0, 288], sizes = [8, 32], strides = [1, 1]} : vector<8x384xbf16> to vector<8x32xbf16>
    %34 = vector.shape_cast %33 : vector<8x32xbf16> to vector<1x8x32xbf16>
    "tpu.trace_start"() <{level = 10 : i32, message = "bqd,bkd->bqk"}> : () -> ()
    %cst_9 = arith.constant dense<0.000000e+00> : vector<1x8x8xf32>
    %35 = tpu.matmul %30, %32, %cst_9 {dimension_numbers = #tpu.dot_dimension_numbers<[2], [2], [1], [1], [0, 0, 0, 1, 1, 1], [0], [0]>} : vector<1x8x32xbf16>, vector<1x8x32xbf16>, vector<1x8x8xf32> -> vector<1x8x8xf32>
    "tpu.trace_stop"() : () -> ()
    %cst_10 = arith.constant dense<0xFF800000> : vector<1x8xf32>
    %36 = vector.multi_reduction <maximumf>, %35, %cst_10 [2] : vector<1x8x8xf32> to vector<1x8xf32>
    %37 = vector.shape_cast %36 : vector<1x8xf32> to vector<1x8x1xf32>
    %38 = vector.broadcast %37 : vector<1x8x1xf32> to vector<1x8x8xf32>
    %39 = arith.subf %35, %38 : vector<1x8x8xf32>
    %40 = math.exp %39 : vector<1x8x8xf32>
    %cst_11 = arith.constant dense<0.000000e+00> : vector<1x8xf32>
    %41 = vector.multi_reduction <add>, %40, %cst_11 [2] : vector<1x8x8xf32> to vector<1x8xf32>
    %42 = vector.shape_cast %41 : vector<1x8xf32> to vector<1x8x1xf32>
    %43 = tpu.reciprocal %42 {approx = true} : vector<1x8x1xf32> -> vector<1x8x1xf32>
    %44 = vector.broadcast %43 : vector<1x8x1xf32> to vector<1x8x8xf32>
    %45 = arith.mulf %40, %44 : vector<1x8x8xf32>
    %46 = arith.truncf %45 : vector<1x8x8xf32> to vector<1x8x8xbf16>
    "tpu.trace_start"() <{level = 10 : i32, message = "bqk,bkd->bqd"}> : () -> ()
    %cst_12 = arith.constant dense<0.000000e+00> : vector<1x8x32xf32>
    %47 = tpu.matmul %46, %34, %cst_12 {dimension_numbers = #tpu.dot_dimension_numbers<[2], [1], [1], [2], [0, 0, 0, 1, 1, 2], [0], [0]>} : vector<1x8x8xbf16>, vector<1x8x32xbf16>, vector<1x8x32xf32> -> vector<1x8x32xf32>
    "tpu.trace_stop"() : () -> ()
    %48 = vector.shape_cast %47 : vector<1x8x32xf32> to vector<8x32xf32>
    %49 = vector.extract_strided_slice %8 {offsets = [0, 64], sizes = [8, 32], strides = [1, 1]} : vector<8x384xbf16> to vector<8x32xbf16>
    %50 = vector.shape_cast %49 : vector<8x32xbf16> to vector<1x8x32xbf16>
    %51 = vector.extract_strided_slice %8 {offsets = [0, 192], sizes = [8, 32], strides = [1, 1]} : vector<8x384xbf16> to vector<8x32xbf16>
    %52 = vector.shape_cast %51 : vector<8x32xbf16> to vector<1x8x32xbf16>
    %53 = vector.extract_strided_slice %8 {offsets = [0, 320], sizes = [8, 32], strides = [1, 1]} : vector<8x384xbf16> to vector<8x32xbf16>
    %54 = vector.shape_cast %53 : vector<8x32xbf16> to vector<1x8x32xbf16>
    "tpu.trace_start"() <{level = 10 : i32, message = "bqd,bkd->bqk"}> : () -> ()
    %cst_13 = arith.constant dense<0.000000e+00> : vector<1x8x8xf32>
    %55 = tpu.matmul %50, %52, %cst_13 {dimension_numbers = #tpu.dot_dimension_numbers<[2], [2], [1], [1], [0, 0, 0, 1, 1, 1], [0], [0]>} : vector<1x8x32xbf16>, vector<1x8x32xbf16>, vector<1x8x8xf32> -> vector<1x8x8xf32>
    "tpu.trace_stop"() : () -> ()
    %cst_14 = arith.constant dense<0xFF800000> : vector<1x8xf32>
    %56 = vector.multi_reduction <maximumf>, %55, %cst_14 [2] : vector<1x8x8xf32> to vector<1x8xf32>
    %57 = vector.shape_cast %56 : vector<1x8xf32> to vector<1x8x1xf32>
    %58 = vector.broadcast %57 : vector<1x8x1xf32> to vector<1x8x8xf32>
    %59 = arith.subf %55, %58 : vector<1x8x8xf32>
    %60 = math.exp %59 : vector<1x8x8xf32>
    %cst_15 = arith.constant dense<0.000000e+00> : vector<1x8xf32>
    %61 = vector.multi_reduction <add>, %60, %cst_15 [2] : vector<1x8x8xf32> to vector<1x8xf32>
    %62 = vector.shape_cast %61 : vector<1x8xf32> to vector<1x8x1xf32>
    %63 = tpu.reciprocal %62 {approx = true} : vector<1x8x1xf32> -> vector<1x8x1xf32>
    %64 = vector.broadcast %63 : vector<1x8x1xf32> to vector<1x8x8xf32>
    %65 = arith.mulf %60, %64 : vector<1x8x8xf32>
    %66 = arith.truncf %65 : vector<1x8x8xf32> to vector<1x8x8xbf16>
    "tpu.trace_start"() <{level = 10 : i32, message = "bqk,bkd->bqd"}> : () -> ()
    %cst_16 = arith.constant dense<0.000000e+00> : vector<1x8x32xf32>
    %67 = tpu.matmul %66, %54, %cst_16 {dimension_numbers = #tpu.dot_dimension_numbers<[2], [1], [1], [2], [0, 0, 0, 1, 1, 2], [0], [0]>} : vector<1x8x8xbf16>, vector<1x8x32xbf16>, vector<1x8x32xf32> -> vector<1x8x32xf32>
    "tpu.trace_stop"() : () -> ()
    %68 = vector.shape_cast %67 : vector<1x8x32xf32> to vector<8x32xf32>
    %69 = vector.extract_strided_slice %8 {offsets = [0, 96], sizes = [8, 32], strides = [1, 1]} : vector<8x384xbf16> to vector<8x32xbf16>
    %70 = vector.shape_cast %69 : vector<8x32xbf16> to vector<1x8x32xbf16>
    %71 = vector.extract_strided_slice %8 {offsets = [0, 224], sizes = [8, 32], strides = [1, 1]} : vector<8x384xbf16> to vector<8x32xbf16>
    %72 = vector.shape_cast %71 : vector<8x32xbf16> to vector<1x8x32xbf16>
    %73 = vector.extract_strided_slice %8 {offsets = [0, 352], sizes = [8, 32], strides = [1, 1]} : vector<8x384xbf16> to vector<8x32xbf16>
    %74 = vector.shape_cast %73 : vector<8x32xbf16> to vector<1x8x32xbf16>
    "tpu.trace_start"() <{level = 10 : i32, message = "bqd,bkd->bqk"}> : () -> ()
    %cst_17 = arith.constant dense<0.000000e+00> : vector<1x8x8xf32>
    %75 = tpu.matmul %70, %72, %cst_17 {dimension_numbers = #tpu.dot_dimension_numbers<[2], [2], [1], [1], [0, 0, 0, 1, 1, 1], [0], [0]>} : vector<1x8x32xbf16>, vector<1x8x32xbf16>, vector<1x8x8xf32> -> vector<1x8x8xf32>
    "tpu.trace_stop"() : () -> ()
    %cst_18 = arith.constant dense<0xFF800000> : vector<1x8xf32>
    %76 = vector.multi_reduction <maximumf>, %75, %cst_18 [2] : vector<1x8x8xf32> to vector<1x8xf32>
    %77 = vector.shape_cast %76 : vector<1x8xf32> to vector<1x8x1xf32>
    %78 = vector.broadcast %77 : vector<1x8x1xf32> to vector<1x8x8xf32>
    %79 = arith.subf %75, %78 : vector<1x8x8xf32>
    %80 = math.exp %79 : vector<1x8x8xf32>
    %cst_19 = arith.constant dense<0.000000e+00> : vector<1x8xf32>
    %81 = vector.multi_reduction <add>, %80, %cst_19 [2] : vector<1x8x8xf32> to vector<1x8xf32>
    %82 = vector.shape_cast %81 : vector<1x8xf32> to vector<1x8x1xf32>
    %83 = tpu.reciprocal %82 {approx = true} : vector<1x8x1xf32> -> vector<1x8x1xf32>
    %84 = vector.broadcast %83 : vector<1x8x1xf32> to vector<1x8x8xf32>
    %85 = arith.mulf %80, %84 : vector<1x8x8xf32>
    %86 = arith.truncf %85 : vector<1x8x8xf32> to vector<1x8x8xbf16>
    "tpu.trace_start"() <{level = 10 : i32, message = "bqk,bkd->bqd"}> : () -> ()
    %cst_20 = arith.constant dense<0.000000e+00> : vector<1x8x32xf32>
    %87 = tpu.matmul %86, %74, %cst_20 {dimension_numbers = #tpu.dot_dimension_numbers<[2], [1], [1], [2], [0, 0, 0, 1, 1, 2], [0], [0]>} : vector<1x8x8xbf16>, vector<1x8x32xbf16>, vector<1x8x32xf32> -> vector<1x8x32xf32>
    "tpu.trace_stop"() : () -> ()
    %88 = vector.shape_cast %87 : vector<1x8x32xf32> to vector<8x32xf32>
    %89 = tpu.concatenate %28, %48, %68, %88 in 1 : vector<8x32xf32>, vector<8x32xf32>, vector<8x32xf32>, vector<8x32xf32> -> vector<8x128xf32>
    %90 = arith.truncf %89 : vector<8x128xf32> to vector<8x128xbf16>
    %c0_21 = arith.constant 0 : index
    %c0_22 = arith.constant 0 : index
    %c0_23 = arith.constant 0 : index
    %91 = vector.load %arg7[%c0_21, %c0_22, %c0_23] : memref<1x128x32xbf16, #tpu.memory_space<vmem>>, vector<1x128x32xbf16>
    %92 = vector.shape_cast %91 : vector<1x128x32xbf16> to vector<128x32xbf16>
    %cst_24 = arith.constant dense<0.000000e+00> : vector<8x32xf32>
    %93 = tpu.matmul %90, %92, %cst_24 {dimension_numbers = #tpu.dot_dimension_numbers<[1], [0], [0], [1], [0, 0, 1, 1], [], []>} : vector<8x128xbf16>, vector<128x32xbf16>, vector<8x32xf32> -> vector<8x32xf32>
    %c0_25 = arith.constant 0 : index
    %c0_26 = arith.constant 0 : index
    %c0_27 = arith.constant 0 : index
    %94 = vector.load %arg8[%c0_25, %c0_26, %c0_27] : memref<1x1x32xf32, #tpu.memory_space<vmem>>, vector<1x1x32xf32>
    %95 = vector.shape_cast %94 : vector<1x1x32xf32> to vector<1x32xf32>
    %96 = vector.broadcast %95 : vector<1x32xf32> to vector<8x32xf32>
    %97 = arith.addf %93, %96 : vector<8x32xf32>
    %98 = arith.addf %97, %3 : vector<8x32xf32>
    %c0_28 = arith.constant 0 : index
    %c0_29 = arith.constant 0 : index
    %c0_30 = arith.constant 0 : index
    %99 = vector.load %arg9[%c0_28, %c0_29, %c0_30] : memref<1x1x32xf32, #tpu.memory_space<vmem>>, vector<1x1x32xf32>
    %100 = vector.shape_cast %99 : vector<1x1x32xf32> to vector<1x32xf32>
    %c0_31 = arith.constant 0 : index
    %c0_32 = arith.constant 0 : index
    %c0_33 = arith.constant 0 : index
    %101 = vector.load %arg10[%c0_31, %c0_32, %c0_33] : memref<1x1x32xf32, #tpu.memory_space<vmem>>, vector<1x1x32xf32>
    %102 = vector.shape_cast %101 : vector<1x1x32xf32> to vector<1x32xf32>
    %cst_34 = arith.constant dense<0.000000e+00> : vector<8xf32>
    %103 = vector.multi_reduction <add>, %98, %cst_34 [1] : vector<8x32xf32> to vector<8xf32>
    %104 = vector.shape_cast %103 : vector<8xf32> to vector<8x1xf32>
    %cst_35 = arith.constant 3.200000e+01 : f32
    %105 = vector.broadcast %cst_35 : f32 to vector<8x1xf32>
    %106 = arith.divf %104, %105 : vector<8x1xf32>
    %107 = vector.broadcast %106 : vector<8x1xf32> to vector<8x32xf32>
    %108 = arith.subf %98, %107 : vector<8x32xf32>
    %109 = arith.mulf %108, %108 : vector<8x32xf32>
    %cst_36 = arith.constant dense<0.000000e+00> : vector<8xf32>
    %110 = vector.multi_reduction <add>, %109, %cst_36 [1] : vector<8x32xf32> to vector<8xf32>
    %111 = vector.shape_cast %110 : vector<8xf32> to vector<8x1xf32>
    %cst_37 = arith.constant 3.200000e+01 : f32
    %112 = vector.broadcast %cst_37 : f32 to vector<8x1xf32>
    %113 = arith.divf %111, %112 : vector<8x1xf32>
    %114 = vector.broadcast %106 : vector<8x1xf32> to vector<8x32xf32>
    %115 = arith.subf %98, %114 : vector<8x32xf32>
    %cst_38 = arith.constant 9.99999974E-6 : f32
    %116 = vector.broadcast %cst_38 : f32 to vector<8x1xf32>
    %117 = arith.addf %113, %116 : vector<8x1xf32>
    %118 = math.rsqrt %117 : vector<8x1xf32>
    %119 = vector.broadcast %118 : vector<8x1xf32> to vector<8x32xf32>
    %120 = arith.mulf %115, %119 : vector<8x32xf32>
    %121 = vector.broadcast %100 : vector<1x32xf32> to vector<8x32xf32>
    %122 = arith.mulf %120, %121 : vector<8x32xf32>
    %123 = vector.broadcast %102 : vector<1x32xf32> to vector<8x32xf32>
    %124 = arith.addf %122, %123 : vector<8x32xf32>
    %125 = arith.truncf %124 : vector<8x32xf32> to vector<8x32xbf16>
    %c0_39 = arith.constant 0 : index
    %c0_40 = arith.constant 0 : index
    %c0_41 = arith.constant 0 : index
    %126 = vector.load %arg11[%c0_39, %c0_40, %c0_41] : memref<1x32x128xbf16, #tpu.memory_space<vmem>>, vector<1x32x128xbf16>
    %127 = vector.shape_cast %126 : vector<1x32x128xbf16> to vector<32x128xbf16>
    %cst_42 = arith.constant dense<0.000000e+00> : vector<8x128xf32>
    %128 = tpu.matmul %125, %127, %cst_42 {dimension_numbers = #tpu.dot_dimension_numbers<[1], [0], [0], [1], [0, 0, 1, 1], [], []>} : vector<8x32xbf16>, vector<32x128xbf16>, vector<8x128xf32> -> vector<8x128xf32>
    %c0_43 = arith.constant 0 : index
    %c0_44 = arith.constant 0 : index
    %c0_45 = arith.constant 0 : index
    %129 = vector.load %arg12[%c0_43, %c0_44, %c0_45] : memref<1x1x128xf32, #tpu.memory_space<vmem>>, vector<1x1x128xf32>
    %130 = vector.shape_cast %129 : vector<1x1x128xf32> to vector<1x128xf32>
    %131 = vector.broadcast %130 : vector<1x128xf32> to vector<8x128xf32>
    %132 = arith.addf %128, %131 : vector<8x128xf32>
    %cst_46 = arith.constant 0.000000e+00 : f32
    %133 = vector.broadcast %cst_46 : f32 to vector<8x128xf32>
    %134 = arith.maximumf %132, %133 : vector<8x128xf32>
    %135 = arith.truncf %134 : vector<8x128xf32> to vector<8x128xbf16>
    %c0_47 = arith.constant 0 : index
    %c0_48 = arith.constant 0 : index
    %c0_49 = arith.constant 0 : index
    %136 = vector.load %arg13[%c0_47, %c0_48, %c0_49] : memref<1x128x32xbf16, #tpu.memory_space<vmem>>, vector<1x128x32xbf16>
    %137 = vector.shape_cast %136 : vector<1x128x32xbf16> to vector<128x32xbf16>
    %cst_50 = arith.constant dense<0.000000e+00> : vector<8x32xf32>
    %138 = tpu.matmul %135, %137, %cst_50 {dimension_numbers = #tpu.dot_dimension_numbers<[1], [0], [0], [1], [0, 0, 1, 1], [], []>} : vector<8x128xbf16>, vector<128x32xbf16>, vector<8x32xf32> -> vector<8x32xf32>
    %c0_51 = arith.constant 0 : index
    %c0_52 = arith.constant 0 : index
    %c0_53 = arith.constant 0 : index
    %139 = vector.load %arg14[%c0_51, %c0_52, %c0_53] : memref<1x1x32xf32, #tpu.memory_space<vmem>>, vector<1x1x32xf32>
    %140 = vector.shape_cast %139 : vector<1x1x32xf32> to vector<1x32xf32>
    %141 = vector.broadcast %140 : vector<1x32xf32> to vector<8x32xf32>
    %142 = arith.addf %138, %141 : vector<8x32xf32>
    %143 = arith.addf %142, %124 : vector<8x32xf32>
    %c0_54 = arith.constant 0 : index
    %c0_55 = arith.constant 0 : index
    %c0_56 = arith.constant 0 : index
    %144 = vector.load %arg15[%c0_54, %c0_55, %c0_56] : memref<1x1x32xf32, #tpu.memory_space<vmem>>, vector<1x1x32xf32>
    %145 = vector.shape_cast %144 : vector<1x1x32xf32> to vector<1x32xf32>
    %c0_57 = arith.constant 0 : index
    %c0_58 = arith.constant 0 : index
    %c0_59 = arith.constant 0 : index
    %146 = vector.load %arg16[%c0_57, %c0_58, %c0_59] : memref<1x1x32xf32, #tpu.memory_space<vmem>>, vector<1x1x32xf32>
    %147 = vector.shape_cast %146 : vector<1x1x32xf32> to vector<1x32xf32>
    %cst_60 = arith.constant dense<0.000000e+00> : vector<8xf32>
    %148 = vector.multi_reduction <add>, %143, %cst_60 [1] : vector<8x32xf32> to vector<8xf32>
    %149 = vector.shape_cast %148 : vector<8xf32> to vector<8x1xf32>
    %cst_61 = arith.constant 3.200000e+01 : f32
    %150 = vector.broadcast %cst_61 : f32 to vector<8x1xf32>
    %151 = arith.divf %149, %150 : vector<8x1xf32>
    %152 = vector.broadcast %151 : vector<8x1xf32> to vector<8x32xf32>
    %153 = arith.subf %143, %152 : vector<8x32xf32>
    %154 = arith.mulf %153, %153 : vector<8x32xf32>
    %cst_62 = arith.constant dense<0.000000e+00> : vector<8xf32>
    %155 = vector.multi_reduction <add>, %154, %cst_62 [1] : vector<8x32xf32> to vector<8xf32>
    %156 = vector.shape_cast %155 : vector<8xf32> to vector<8x1xf32>
    %cst_63 = arith.constant 3.200000e+01 : f32
    %157 = vector.broadcast %cst_63 : f32 to vector<8x1xf32>
    %158 = arith.divf %156, %157 : vector<8x1xf32>
    %159 = vector.broadcast %151 : vector<8x1xf32> to vector<8x32xf32>
    %160 = arith.subf %143, %159 : vector<8x32xf32>
    %cst_64 = arith.constant 9.99999974E-6 : f32
    %161 = vector.broadcast %cst_64 : f32 to vector<8x1xf32>
    %162 = arith.addf %158, %161 : vector<8x1xf32>
    %163 = math.rsqrt %162 : vector<8x1xf32>
    %164 = vector.broadcast %163 : vector<8x1xf32> to vector<8x32xf32>
    %165 = arith.mulf %160, %164 : vector<8x32xf32>
    %166 = vector.broadcast %145 : vector<1x32xf32> to vector<8x32xf32>
    %167 = arith.mulf %165, %166 : vector<8x32xf32>
    %168 = vector.broadcast %147 : vector<1x32xf32> to vector<8x32xf32>
    %169 = arith.addf %167, %168 : vector<8x32xf32>
    %c0_65 = arith.constant 0 : index
    %c0_66 = arith.constant 0 : index
    %170 = vector.load %arg20[%c0_65, %c0_66] : memref<8x32xf32, #tpu.memory_space<vmem>>, vector<8x32xf32>
    tpu.vector_store %arg20[%c0_65, %c0_66], %169 {strides = array<i32>} : memref<8x32xf32, #tpu.memory_space<vmem>>, vector<8x32xf32>,
    %c1_i32 = arith.constant 1 : i32
    %171 = arith.cmpi eq, %arg1, %c1_i32 : i32
    %172 = arith.extui %171 : i1 to i32
    %c0_i32_67 = arith.constant 0 : i32
    %173 = arith.cmpi ne, %172, %c0_i32_67 : i32
    scf.if %173 {
      %174 = vector.shape_cast %169 : vector<8x32xf32> to vector<1x8x32xf32>
      %c0_68 = arith.constant 0 : index
      %c0_69 = arith.constant 0 : index
      %175 = vector.load %arg17[%c0_68, %c0_69] : memref<1x32xf32, #tpu.memory_space<vmem>>, vector<1x32xf32>
      %176 = vector.shape_cast %175 : vector<1x32xf32> to vector<1x1x32xf32>
      %177 = vector.broadcast %176 : vector<1x1x32xf32> to vector<1x8x32xf32>
      %178 = arith.mulf %174, %177 : vector<1x8x32xf32>
      %cst_70 = arith.constant dense<0.000000e+00> : vector<1x8xf32>
      %179 = vector.multi_reduction <add>, %178, %cst_70 [2] : vector<1x8x32xf32> to vector<1x8xf32>
      %c0_71 = arith.constant 0 : index
      %c0_72 = arith.constant 0 : index
      %180 = memref.load %arg18[%c0_71, %c0_72] : memref<1x1xf32, #tpu.memory_space<smem>>
      %181 = vector.broadcast %180 : f32 to vector<1x8xf32>
      %182 = arith.addf %179, %181 : vector<1x8xf32>
      %183 = arith.negf %182 : vector<1x8xf32>
      %184 = math.exp %183 : vector<1x8xf32>
      %cst_73 = arith.constant 1.000000e+00 : f32
      %185 = vector.broadcast %cst_73 : f32 to vector<1x8xf32>
      %186 = arith.addf %185, %184 : vector<1x8xf32>
      %187 = arith.divf %185, %186 : vector<1x8xf32>
      %c0_74 = arith.constant 0 : index
      %c0_75 = arith.constant 0 : index
      %c0_76 = arith.constant 0 : index
      %188 = vector.load %arg19[%c0_74, %c0_75, %c0_76] : memref<1x1x8xf32, #tpu.memory_space<vmem>>, vector<1x1x8xf32>
      %189 = vector.shape_cast %188 : vector<1x1x8xf32> to vector<1x8xf32>
      %190 = vector.shape_cast %187 : vector<1x8xf32> to vector<1x1x8xf32>
      tpu.vector_store %arg19[%c0_74, %c0_75, %c0_76], %190 {strides = array<i32>} : memref<1x1x8xf32, #tpu.memory_space<vmem>>, vector<1x1x8xf32>,
    } else {
    }
    return
  }
  func.func @transform_0(%arg0: i32, %arg1: i32) -> (i32, i32) {
    %c0_i32 = arith.constant 0 : i32
    %c0_i32_0 = arith.constant 0 : i32
    return %arg0, %c0_i32 : i32, i32
  }
  func.func @transform_1(%arg0: i32, %arg1: i32) -> (i32, i32) {
    %c0_i32 = arith.constant 0 : i32
    %c0_i32_0 = arith.constant 0 : i32
    %c0_i32_1 = arith.constant 0 : i32
    return %c0_i32, %c0_i32_0 : i32, i32
  }
  func.func @transform_2(%arg0: i32, %arg1: i32) -> (i32, i32) {
    %c0_i32 = arith.constant 0 : i32
    %c0_i32_0 = arith.constant 0 : i32
    %c0_i32_1 = arith.constant 0 : i32
    return %c0_i32, %c0_i32_0 : i32, i32
  }
  func.func @transform_3(%arg0: i32, %arg1: i32) -> (i32, i32) {
    %c0_i32 = arith.constant 0 : i32
    %c0_i32_0 = arith.constant 0 : i32
    %c0_i32_1 = arith.constant 0 : i32
    return %c0_i32, %c0_i32_0 : i32, i32
  }
  func.func @transform_4(%arg0: i32, %arg1: i32) -> (i32, i32, i32) {
    %c0_i32 = arith.constant 0 : i32
    %c0_i32_0 = arith.constant 0 : i32
    %c0_i32_1 = arith.constant 0 : i32
    return %arg1, %c0_i32, %c0_i32_0 : i32, i32, i32
  }
  func.func @transform_5(%arg0: i32, %arg1: i32) -> (i32, i32, i32) {
    %c0_i32 = arith.constant 0 : i32
    %c0_i32_0 = arith.constant 0 : i32
    %c0_i32_1 = arith.constant 0 : i32
    return %arg1, %c0_i32, %c0_i32_0 : i32, i32, i32
  }
  func.func @transform_6(%arg0: i32, %arg1: i32) -> (i32, i32, i32) {
    %c0_i32 = arith.constant 0 : i32
    %c0_i32_0 = arith.constant 0 : i32
    %c0_i32_1 = arith.constant 0 : i32
    return %arg1, %c0_i32, %c0_i32_0 : i32, i32, i32
  }
  func.func @transform_7(%arg0: i32, %arg1: i32) -> (i32, i32, i32) {
    %c0_i32 = arith.constant 0 : i32
    %c0_i32_0 = arith.constant 0 : i32
    %c0_i32_1 = arith.constant 0 : i32
    return %arg1, %c0_i32, %c0_i32_0 : i32, i32, i32
  }
  func.func @transform_8(%arg0: i32, %arg1: i32) -> (i32, i32, i32) {
    %c0_i32 = arith.constant 0 : i32
    %c0_i32_0 = arith.constant 0 : i32
    %c0_i32_1 = arith.constant 0 : i32
    return %arg1, %c0_i32, %c0_i32_0 : i32, i32, i32
  }
  func.func @transform_9(%arg0: i32, %arg1: i32) -> (i32, i32, i32) {
    %c0_i32 = arith.constant 0 : i32
    %c0_i32_0 = arith.constant 0 : i32
    %c0_i32_1 = arith.constant 0 : i32
    return %arg1, %c0_i32, %c0_i32_0 : i32, i32, i32
  }
  func.func @transform_10(%arg0: i32, %arg1: i32) -> (i32, i32, i32) {
    %c0_i32 = arith.constant 0 : i32
    %c0_i32_0 = arith.constant 0 : i32
    %c0_i32_1 = arith.constant 0 : i32
    return %arg1, %c0_i32, %c0_i32_0 : i32, i32, i32
  }
  func.func @transform_11(%arg0: i32, %arg1: i32) -> (i32, i32, i32) {
    %c0_i32 = arith.constant 0 : i32
    %c0_i32_0 = arith.constant 0 : i32
    %c0_i32_1 = arith.constant 0 : i32
    return %arg1, %c0_i32, %c0_i32_0 : i32, i32, i32
  }
  func.func @transform_12(%arg0: i32, %arg1: i32) -> (i32, i32, i32) {
    %c0_i32 = arith.constant 0 : i32
    %c0_i32_0 = arith.constant 0 : i32
    %c0_i32_1 = arith.constant 0 : i32
    return %arg1, %c0_i32, %c0_i32_0 : i32, i32, i32
  }
  func.func @transform_13(%arg0: i32, %arg1: i32) -> (i32, i32, i32) {
    %c0_i32 = arith.constant 0 : i32
    %c0_i32_0 = arith.constant 0 : i32
    %c0_i32_1 = arith.constant 0 : i32
    return %arg1, %c0_i32, %c0_i32_0 : i32, i32, i32
  }
  func.func @transform_14(%arg0: i32, %arg1: i32) -> (i32, i32, i32) {
    %c0_i32 = arith.constant 0 : i32
    %c0_i32_0 = arith.constant 0 : i32
    %c0_i32_1 = arith.constant 0 : i32
    return %arg1, %c0_i32, %c0_i32_0 : i32, i32, i32
  }
  func.func @transform_15(%arg0: i32, %arg1: i32) -> (i32, i32) {
    %c0_i32 = arith.constant 0 : i32
    %c0_i32_0 = arith.constant 0 : i32
    %c0_i32_1 = arith.constant 0 : i32
    return %c0_i32, %c0_i32_0 : i32, i32
  }
  func.func @transform_16(%arg0: i32, %arg1: i32) -> (i32, i32) {
    %c0_i32 = arith.constant 0 : i32
    %c0_i32_0 = arith.constant 0 : i32
    %c0_i32_1 = arith.constant 0 : i32
    return %c0_i32, %c0_i32_0 : i32, i32
  }
  func.func @transform_17(%arg0: i32, %arg1: i32) -> (i32, i32, i32) {
    %c0_i32 = arith.constant 0 : i32
    %c0_i32_0 = arith.constant 0 : i32
    %c0_i32_1 = arith.constant 0 : i32
    return %arg0, %c0_i32, %c0_i32_0 : i32, i32, i32
  }
}

</mosaic_0001>

<llo_original>
// kernel: tpu_custom_call.1
$region0: #{tpu_custom_call.1}
  #allocation0 [shape = 'u32[]', space=smem, size = 0x4, offset = 0x4, fixed_abs, tag = 'smem constant byte address 0x4 - core index']
  #allocation1 [shape = 'u32[72,128]{1,0:T(1,128)}', space=vmem, size = 0x9000, scoped, tag = 'internal scratch']
  #allocation2 [shape = 'f32[8,32]{1,0:T(8,128)}', space=vmem, size = 0x1000, scoped, tag = 'scratch operand']
  #allocation3 [shape = 'f32[1,1]{1,0:T(1,128)S(6)}', space=smem, size = 0x200, scoped, tag = 'scoped memory for tpu_custom_call.1']
  %s0 = inlined_call_operand.vmem [shape: f32[16,4], index: 0, kind: input, shape index: {}]
  %s1 = inlined_call_operand.vmem [shape: bf16[4,32], index: 1, kind: input, shape index: {}]
  %s2 = inlined_call_operand.vmem [shape: f32[1,32], index: 2, kind: input, shape index: {}]
  %s3 = inlined_call_operand.vmem [shape: f32[8,32], index: 3, kind: input, shape index: {}]
  %s4 = inlined_call_operand.vmem [shape: bf16[2,32,384], index: 4, kind: input, shape index: {}]
  %s5 = inlined_call_operand.vmem [shape: bf16[2,128,32], index: 5, kind: input, shape index: {}]
  %s6 = inlined_call_operand.vmem [shape: f32[2,1,32], index: 6, kind: input, shape index: {}]
  %s7 = inlined_call_operand.vmem [shape: f32[2,1,32], index: 7, kind: input, shape index: {}]
  %s8 = inlined_call_operand.vmem [shape: f32[2,1,32], index: 8, kind: input, shape index: {}]
  %s9 = inlined_call_operand.vmem [shape: bf16[2,32,128], index: 9, kind: input, shape index: {}]
  %s10 = inlined_call_operand.vmem [shape: f32[2,1,128], index: 10, kind: input, shape index: {}]
  %s11 = inlined_call_operand.vmem [shape: bf16[2,128,32], index: 11, kind: input, shape index: {}]
  %s12 = inlined_call_operand.vmem [shape: f32[2,1,32], index: 12, kind: input, shape index: {}]
  %s13 = inlined_call_operand.vmem [shape: f32[2,1,32], index: 13, kind: input, shape index: {}]
  %s14 = inlined_call_operand.vmem [shape: f32[2,1,32], index: 14, kind: input, shape index: {}]
  %s15 = inlined_call_operand.vmem [shape: f32[1,32], index: 15, kind: input, shape index: {}]
  %s16 = inlined_call_operand.<no memory space> [shape: f32[1,1], index: 16, kind: input, shape index: {}]
  %s17 = inlined_call_operand.hbm [shape: f32[2,1,8], index: 17, kind: output, shape index: {}]
  %s18 = sld [smem:[#allocation0]]
  $region109: #{tpu_custom_call.1} parent=0
    _
  %s20 = ssub.s32 1, %s18
  %s21 = scalar_select 0, %s20, %s18
  %22 = sst [smem:[#allocation3]] %s16
  $region1: #{tpu_custom_call.1} parent=0
    #allocation4 [shape = 'u8[1024]{0}', space=vmem, size = 0x400, scoped, tag = 'output window, operand 0']
    #allocation5 [shape = 's32[2]{0}', space=sflag, size = 0x8, scoped, tag = 'scoped memory for tpu_custom_call.1']
    %23 = vsyncpa [#allocation5], 0
    %s24 = scalar_lea.sflag [#allocation5], 1
    %25 = vsyncpa %s24, 0
    loop: start=0, step=1, limit=6
    $region2: #{tpu_custom_call.1} parent=1 // loop_pre_header
      _
    $region3: #{tpu_custom_call.1} parent=1 // loop_header
      %s27 = sphi 0, %s31
      %p28 = scmp.ge.s32.totalorder %s27, 6
      %s34 = sphi 0, %s46
      %s35 = sphi 0, %s42
      %s36 = sphi 0, %s34
      %s37 = sphi 0, %s35
      %s38 = sphi 0, %s36
      %s39 = sphi 0, %s37
      %s49 = sphi 0, %s51
      %s52 = sphi 0, %s49
      %s53 = sphi 0, %s52
      %s69 = sphi 0, %s53
      %s73 = sphi 0, %s73
      %s75 = sphi 0, %s73
      %s76 = sphi 0, %s75
      %s90 = sphi 0, %s76
      %s94 = sphi 0, %s94
      %s96 = sphi 0, %s94
      %s97 = sphi 0, %s96
      %s111 = sphi 0, %s97
      %s115 = sphi 0, %s115
      %s117 = sphi 0, %s115
      %s118 = sphi 0, %s117
      %s132 = sphi 0, %s118
      %s138 = sphi 0, %s140
      %s141 = sphi 0, %s138
      %s142 = sphi 0, %s141
      %s158 = sphi 0, %s142
      %s164 = sphi 0, %s166
      %s167 = sphi 0, %s164
      %s168 = sphi 0, %s167
      %s184 = sphi 0, %s168
      %s190 = sphi 0, %s192
      %s193 = sphi 0, %s190
      %s194 = sphi 0, %s193
      %s210 = sphi 0, %s194
      %s216 = sphi 0, %s218
      %s219 = sphi 0, %s216
      %s220 = sphi 0, %s219
      %s236 = sphi 0, %s220
      %s242 = sphi 0, %s244
      %s245 = sphi 0, %s242
      %s246 = sphi 0, %s245
      %s262 = sphi 0, %s246
      %s268 = sphi 0, %s270
      %s271 = sphi 0, %s268
      %s272 = sphi 0, %s271
      %s288 = sphi 0, %s272
      %s294 = sphi 0, %s296
      %s297 = sphi 0, %s294
      %s298 = sphi 0, %s297
      %s314 = sphi 0, %s298
      %s320 = sphi 0, %s322
      %s323 = sphi 0, %s320
      %s324 = sphi 0, %s323
      %s340 = sphi 0, %s324
      %s346 = sphi 0, %s348
      %s349 = sphi 0, %s346
      %s350 = sphi 0, %s349
      %s366 = sphi 0, %s350
      %s372 = sphi 0, %s374
      %s375 = sphi 0, %s372
      %s376 = sphi 0, %s375
      %s392 = sphi 0, %s376
      %s398 = sphi 0, %s400
      %s401 = sphi 0, %s398
      %s402 = sphi 0, %s401
      %s418 = sphi 0, %s402
      %s422 = sphi 0, %s422
      %s424 = sphi 0, %s422
      %s425 = sphi 0, %s424
      %s439 = sphi 0, %s425
      %s443 = sphi 0, %s443
      %s445 = sphi 0, %s443
      %s446 = sphi 0, %s445
      %s460 = sphi 0, %s446
      %s466 = sphi 0, %s468
      %s469 = sphi 0, %s466
      %s470 = sphi 0, %s469
      %s486 = sphi 0, %s470
    $region4: #{tpu_custom_call.1} parent=1 // loop_header_branch
      %30 = sbr.rel (%p28) target = $region8
    $region5: #{tpu_custom_call.1} parent=1 // loop_body
      %s32 = ssub.s32 %s27, 1
      %s33 = ssub.s32 %s27, 2
      %s40 = sadd.s32 1, %s35
      %p41 = scmp.ge.s32.totalorder %s40, 2
      %s42 = scalar_select %p41, 0, %s40
      %s43 = sadd.s32 1, %s34
      %s44 = scalar_select %p41, %s43, %s34
      %p45 = scmp.ge.s32.totalorder %s44, 2
      %s46 = scalar_select %p45, 0, %s44
      %s47 = ssub.s32 %s34, %s46
      %p48 = scmp.eq.s32.totalorder %s47, 0
      %s50 = sadd.s32 %s49, 1
      %s51 = scalar_select %p48, %s49, %s50
      %p54 = pneg %p48
      %p55 = scmp.eq.s32.totalorder %s27, 3
      %p56 = por %p54, %p55
      %p57 = scmp.ne.s32.totalorder %s49, %s52
      %p58 = scmp.eq.s32.totalorder %s27, 0
      %p59 = por %p57, %p58
      %p60 = scmp.ne.s32.totalorder %s49, %s52
      %p61 = scmp.eq.s32.totalorder %s32, 3
      %p62 = por %p60, %p61
      %p63 = scmp.ne.s32.totalorder %s52, %s53
      %p64 = scmp.eq.s32.totalorder %s32, 0
      %p65 = por %p63, %p64
      %p66 = scmp.ne.s32.totalorder %s52, %s53
      %p67 = scmp.eq.s32.totalorder %s33, 3
      %p68 = por %p66, %p67
      %p70 = scmp.ne.s32.totalorder %s53, %s69
      %p71 = scmp.eq.s32.totalorder %s33, 0
      %p72 = por %p70, %p71
      %s74 = sadd.s32 %s73, 1
      %p77 = scmp.eq.s32.totalorder %s27, 3
      %p78 = scmp.ne.s32.totalorder %s73, %s75
      %p79 = scmp.eq.s32.totalorder %s27, 0
      %p80 = por %p78, %p79
      %p81 = scmp.ne.s32.totalorder %s73, %s75
      %p82 = scmp.eq.s32.totalorder %s32, 3
      %p83 = por %p81, %p82
      %p84 = scmp.ne.s32.totalorder %s75, %s76
      %p85 = scmp.eq.s32.totalorder %s32, 0
      %p86 = por %p84, %p85
      %p87 = scmp.ne.s32.totalorder %s75, %s76
      %p88 = scmp.eq.s32.totalorder %s33, 3
      %p89 = por %p87, %p88
      %p91 = scmp.ne.s32.totalorder %s76, %s90
      %p92 = scmp.eq.s32.totalorder %s33, 0
      %p93 = por %p91, %p92
      %s95 = sadd.s32 %s94, 1
      %p98 = scmp.eq.s32.totalorder %s27, 3
      %p99 = scmp.ne.s32.totalorder %s94, %s96
      %p100 = scmp.eq.s32.totalorder %s27, 0
      %p101 = por %p99, %p100
      %p102 = scmp.ne.s32.totalorder %s94, %s96
      %p103 = scmp.eq.s32.totalorder %s32, 3
      %p104 = por %p102, %p103
      %p105 = scmp.ne.s32.totalorder %s96, %s97
      %p106 = scmp.eq.s32.totalorder %s32, 0
      %p107 = por %p105, %p106
      %p108 = scmp.ne.s32.totalorder %s96, %s97
      %p109 = scmp.eq.s32.totalorder %s33, 3
      %p110 = por %p108, %p109
      %p112 = scmp.ne.s32.totalorder %s97, %s111
      %p113 = scmp.eq.s32.totalorder %s33, 0
      %p114 = por %p112, %p113
      %s116 = sadd.s32 %s115, 1
      %p119 = scmp.eq.s32.totalorder %s27, 3
      %p120 = scmp.ne.s32.totalorder %s115, %s117
      %p121 = scmp.eq.s32.totalorder %s27, 0
      %p122 = por %p120, %p121
      %p123 = scmp.ne.s32.totalorder %s115, %s117
      %p124 = scmp.eq.s32.totalorder %s32, 3
      %p125 = por %p123, %p124
      %p126 = scmp.ne.s32.totalorder %s117, %s118
      %p127 = scmp.eq.s32.totalorder %s32, 0
      %p128 = por %p126, %p127
      %p129 = scmp.ne.s32.totalorder %s117, %s118
      %p130 = scmp.eq.s32.totalorder %s33, 3
      %p131 = por %p129, %p130
      %p133 = scmp.ne.s32.totalorder %s118, %s132
      %p134 = scmp.eq.s32.totalorder %s33, 0
      %p135 = por %p133, %p134
      %s136 = ssub.s32 %s35, %s42
      %p137 = scmp.eq.s32.totalorder %s136, 0
      %s139 = sadd.s32 %s138, 1
      %s140 = scalar_select %p137, %s138, %s139
      %p143 = pneg %p137
      %p144 = scmp.eq.s32.totalorder %s27, 3
      %p145 = por %p143, %p144
      %p146 = scmp.ne.s32.totalorder %s138, %s141
      %p147 = scmp.eq.s32.totalorder %s27, 0
      %p148 = por %p146, %p147
      %p149 = scmp.ne.s32.totalorder %s138, %s141
      %p150 = scmp.eq.s32.totalorder %s32, 3
      %p151 = por %p149, %p150
      %p152 = scmp.ne.s32.totalorder %s141, %s142
      %p153 = scmp.eq.s32.totalorder %s32, 0
      %p154 = por %p152, %p153
      %p155 = scmp.ne.s32.totalorder %s141, %s142
      %p156 = scmp.eq.s32.totalorder %s33, 3
      %p157 = por %p155, %p156
      %p159 = scmp.ne.s32.totalorder %s142, %s158
      %p160 = scmp.eq.s32.totalorder %s33, 0
      %p161 = por %p159, %p160
      %s162 = ssub.s32 %s35, %s42
      %p163 = scmp.eq.s32.totalorder %s162, 0
      %s165 = sadd.s32 %s164, 1
      %s166 = scalar_select %p163, %s164, %s165
      %p169 = pneg %p163
      %p170 = scmp.eq.s32.totalorder %s27, 3
      %p171 = por %p169, %p170
      %p172 = scmp.ne.s32.totalorder %s164, %s167
      %p173 = scmp.eq.s32.totalorder %s27, 0
      %p174 = por %p172, %p173
      %p175 = scmp.ne.s32.totalorder %s164, %s167
      %p176 = scmp.eq.s32.totalorder %s32, 3
      %p177 = por %p175, %p176
      %p178 = scmp.ne.s32.totalorder %s167, %s168
      %p179 = scmp.eq.s32.totalorder %s32, 0
      %p180 = por %p178, %p179
      %p181 = scmp.ne.s32.totalorder %s167, %s168
      %p182 = scmp.eq.s32.totalorder %s33, 3
      %p183 = por %p181, %p182
      %p185 = scmp.ne.s32.totalorder %s168, %s184
      %p186 = scmp.eq.s32.totalorder %s33, 0
      %p187 = por %p185, %p186
      %s188 = ssub.s32 %s35, %s42
      %p189 = scmp.eq.s32.totalorder %s188, 0
      %s191 = sadd.s32 %s190, 1
      %s192 = scalar_select %p189, %s190, %s191
      %p195 = pneg %p189
      %p196 = scmp.eq.s32.totalorder %s27, 3
      %p197 = por %p195, %p196
      %p198 = scmp.ne.s32.totalorder %s190, %s193
      %p199 = scmp.eq.s32.totalorder %s27, 0
      %p200 = por %p198, %p199
      %p201 = scmp.ne.s32.totalorder %s190, %s193
      %p202 = scmp.eq.s32.totalorder %s32, 3
      %p203 = por %p201, %p202
      %p204 = scmp.ne.s32.totalorder %s193, %s194
      %p205 = scmp.eq.s32.totalorder %s32, 0
      %p206 = por %p204, %p205
      %p207 = scmp.ne.s32.totalorder %s193, %s194
      %p208 = scmp.eq.s32.totalorder %s33, 3
      %p209 = por %p207, %p208
      %p211 = scmp.ne.s32.totalorder %s194, %s210
      %p212 = scmp.eq.s32.totalorder %s33, 0
      %p213 = por %p211, %p212
      %s214 = ssub.s32 %s35, %s42
      %p215 = scmp.eq.s32.totalorder %s214, 0
      %s217 = sadd.s32 %s216, 1
      %s218 = scalar_select %p215, %s216, %s217
      %p221 = pneg %p215
      %p222 = scmp.eq.s32.totalorder %s27, 3
      %p223 = por %p221, %p222
      %p224 = scmp.ne.s32.totalorder %s216, %s219
      %p225 = scmp.eq.s32.totalorder %s27, 0
      %p226 = por %p224, %p225
      %p227 = scmp.ne.s32.totalorder %s216, %s219
      %p228 = scmp.eq.s32.totalorder %s32, 3
      %p229 = por %p227, %p228
      %p230 = scmp.ne.s32.totalorder %s219, %s220
      %p231 = scmp.eq.s32.totalorder %s32, 0
      %p232 = por %p230, %p231
      %p233 = scmp.ne.s32.totalorder %s219, %s220
      %p234 = scmp.eq.s32.totalorder %s33, 3
      %p235 = por %p233, %p234
      %p237 = scmp.ne.s32.totalorder %s220, %s236
      %p238 = scmp.eq.s32.totalorder %s33, 0
      %p239 = por %p237, %p238
      %s240 = ssub.s32 %s35, %s42
      %p241 = scmp.eq.s32.totalorder %s240, 0
      %s243 = sadd.s32 %s242, 1
      %s244 = scalar_select %p241, %s242, %s243
      %p247 = pneg %p241
      %p248 = scmp.eq.s32.totalorder %s27, 3
      %p249 = por %p247, %p248
      %p250 = scmp.ne.s32.totalorder %s242, %s245
      %p251 = scmp.eq.s32.totalorder %s27, 0
      %p252 = por %p250, %p251
      %p253 = scmp.ne.s32.totalorder %s242, %s245
      %p254 = scmp.eq.s32.totalorder %s32, 3
      %p255 = por %p253, %p254
      %p256 = scmp.ne.s32.totalorder %s245, %s246
      %p257 = scmp.eq.s32.totalorder %s32, 0
      %p258 = por %p256, %p257
      %p259 = scmp.ne.s32.totalorder %s245, %s246
      %p260 = scmp.eq.s32.totalorder %s33, 3
      %p261 = por %p259, %p260
      %p263 = scmp.ne.s32.totalorder %s246, %s262
      %p264 = scmp.eq.s32.totalorder %s33, 0
      %p265 = por %p263, %p264
      %s266 = ssub.s32 %s35, %s42
      %p267 = scmp.eq.s32.totalorder %s266, 0
      %s269 = sadd.s32 %s268, 1
      %s270 = scalar_select %p267, %s268, %s269
      %p273 = pneg %p267
      %p274 = scmp.eq.s32.totalorder %s27, 3
      %p275 = por %p273, %p274
      %p276 = scmp.ne.s32.totalorder %s268, %s271
      %p277 = scmp.eq.s32.totalorder %s27, 0
      %p278 = por %p276, %p277
      %p279 = scmp.ne.s32.totalorder %s268, %s271
      %p280 = scmp.eq.s32.totalorder %s32, 3
      %p281 = por %p279, %p280
      %p282 = scmp.ne.s32.totalorder %s271, %s272
      %p283 = scmp.eq.s32.totalorder %s32, 0
      %p284 = por %p282, %p283
      %p285 = scmp.ne.s32.totalorder %s271, %s272
      %p286 = scmp.eq.s32.totalorder %s33, 3
      %p287 = por %p285, %p286
      %p289 = scmp.ne.s32.totalorder %s272, %s288
      %p290 = scmp.eq.s32.totalorder %s33, 0
      %p291 = por %p289, %p290
      %s292 = ssub.s32 %s35, %s42
      %p293 = scmp.eq.s32.totalorder %s292, 0
      %s295 = sadd.s32 %s294, 1
      %s296 = scalar_select %p293, %s294, %s295
      %p299 = pneg %p293
      %p300 = scmp.eq.s32.totalorder %s27, 3
      %p301 = por %p299, %p300
      %p302 = scmp.ne.s32.totalorder %s294, %s297
      %p303 = scmp.eq.s32.totalorder %s27, 0
      %p304 = por %p302, %p303
      %p305 = scmp.ne.s32.totalorder %s294, %s297
      %p306 = scmp.eq.s32.totalorder %s32, 3
      %p307 = por %p305, %p306
      %p308 = scmp.ne.s32.totalorder %s297, %s298
      %p309 = scmp.eq.s32.totalorder %s32, 0
      %p310 = por %p308, %p309
      %p311 = scmp.ne.s32.totalorder %s297, %s298
      %p312 = scmp.eq.s32.totalorder %s33, 3
      %p313 = por %p311, %p312
      %p315 = scmp.ne.s32.totalorder %s298, %s314
      %p316 = scmp.eq.s32.totalorder %s33, 0
      %p317 = por %p315, %p316
      %s318 = ssub.s32 %s35, %s42
      %p319 = scmp.eq.s32.totalorder %s318, 0
      %s321 = sadd.s32 %s320, 1
      %s322 = scalar_select %p319, %s320, %s321
      %p325 = pneg %p319
      %p326 = scmp.eq.s32.totalorder %s27, 3
      %p327 = por %p325, %p326
      %p328 = scmp.ne.s32.totalorder %s320, %s323
      %p329 = scmp.eq.s32.totalorder %s27, 0
      %p330 = por %p328, %p329
      %p331 = scmp.ne.s32.totalorder %s320, %s323
      %p332 = scmp.eq.s32.totalorder %s32, 3
      %p333 = por %p331, %p332
      %p334 = scmp.ne.s32.totalorder %s323, %s324
      %p335 = scmp.eq.s32.totalorder %s32, 0
      %p336 = por %p334, %p335
      %p337 = scmp.ne.s32.totalorder %s323, %s324
      %p338 = scmp.eq.s32.totalorder %s33, 3
      %p339 = por %p337, %p338
      %p341 = scmp.ne.s32.totalorder %s324, %s340
      %p342 = scmp.eq.s32.totalorder %s33, 0
      %p343 = por %p341, %p342
      %s344 = ssub.s32 %s35, %s42
      %p345 = scmp.eq.s32.totalorder %s344, 0
      %s347 = sadd.s32 %s346, 1
      %s348 = scalar_select %p345, %s346, %s347
      %p351 = pneg %p345
      %p352 = scmp.eq.s32.totalorder %s27, 3
      %p353 = por %p351, %p352
      %p354 = scmp.ne.s32.totalorder %s346, %s349
      %p355 = scmp.eq.s32.totalorder %s27, 0
      %p356 = por %p354, %p355
      %p357 = scmp.ne.s32.totalorder %s346, %s349
      %p358 = scmp.eq.s32.totalorder %s32, 3
      %p359 = por %p357, %p358
      %p360 = scmp.ne.s32.totalorder %s349, %s350
      %p361 = scmp.eq.s32.totalorder %s32, 0
      %p362 = por %p360, %p361
      %p363 = scmp.ne.s32.totalorder %s349, %s350
      %p364 = scmp.eq.s32.totalorder %s33, 3
      %p365 = por %p363, %p364
      %p367 = scmp.ne.s32.totalorder %s350, %s366
      %p368 = scmp.eq.s32.totalorder %s33, 0
      %p369 = por %p367, %p368
      %s370 = ssub.s32 %s35, %s42
      %p371 = scmp.eq.s32.totalorder %s370, 0
      %s373 = sadd.s32 %s372, 1
      %s374 = scalar_select %p371, %s372, %s373
      %p377 = pneg %p371
      %p378 = scmp.eq.s32.totalorder %s27, 3
      %p379 = por %p377, %p378
      %p380 = scmp.ne.s32.totalorder %s372, %s375
      %p381 = scmp.eq.s32.totalorder %s27, 0
      %p382 = por %p380, %p381
      %p383 = scmp.ne.s32.totalorder %s372, %s375
      %p384 = scmp.eq.s32.totalorder %s32, 3
      %p385 = por %p383, %p384
      %p386 = scmp.ne.s32.totalorder %s375, %s376
      %p387 = scmp.eq.s32.totalorder %s32, 0
      %p388 = por %p386, %p387
      %p389 = scmp.ne.s32.totalorder %s375, %s376
      %p390 = scmp.eq.s32.totalorder %s33, 3
      %p391 = por %p389, %p390
      %p393 = scmp.ne.s32.totalorder %s376, %s392
      %p394 = scmp.eq.s32.totalorder %s33, 0
      %p395 = por %p393, %p394
      %s396 = ssub.s32 %s35, %s42
      %p397 = scmp.eq.s32.totalorder %s396, 0
      %s399 = sadd.s32 %s398, 1
      %s400 = scalar_select %p397, %s398, %s399
      %p403 = pneg %p397
      %p404 = scmp.eq.s32.totalorder %s27, 3
      %p405 = por %p403, %p404
      %p406 = scmp.ne.s32.totalorder %s398, %s401
      %p407 = scmp.eq.s32.totalorder %s27, 0
      %p408 = por %p406, %p407
      %p409 = scmp.ne.s32.totalorder %s398, %s401
      %p410 = scmp.eq.s32.totalorder %s32, 3
      %p411 = por %p409, %p410
      %p412 = scmp.ne.s32.totalorder %s401, %s402
      %p413 = scmp.eq.s32.totalorder %s32, 0
      %p414 = por %p412, %p413
      %p415 = scmp.ne.s32.totalorder %s401, %s402
      %p416 = scmp.eq.s32.totalorder %s33, 3
      %p417 = por %p415, %p416
      %p419 = scmp.ne.s32.totalorder %s402, %s418
      %p420 = scmp.eq.s32.totalorder %s33, 0
      %p421 = por %p419, %p420
      %s423 = sadd.s32 %s422, 1
      %p426 = scmp.eq.s32.totalorder %s27, 3
      %p427 = scmp.ne.s32.totalorder %s422, %s424
      %p428 = scmp.eq.s32.totalorder %s27, 0
      %p429 = por %p427, %p428
      %p430 = scmp.ne.s32.totalorder %s422, %s424
      %p431 = scmp.eq.s32.totalorder %s32, 3
      %p432 = por %p430, %p431
      %p433 = scmp.ne.s32.totalorder %s424, %s425
      %p434 = scmp.eq.s32.totalorder %s32, 0
      %p435 = por %p433, %p434
      %p436 = scmp.ne.s32.totalorder %s424, %s425
      %p437 = scmp.eq.s32.totalorder %s33, 3
      %p438 = por %p436, %p437
      %p440 = scmp.ne.s32.totalorder %s425, %s439
      %p441 = scmp.eq.s32.totalorder %s33, 0
      %p442 = por %p440, %p441
      %s444 = sadd.s32 %s443, 1
      %p447 = scmp.eq.s32.totalorder %s27, 3
      %p448 = scmp.ne.s32.totalorder %s443, %s445
      %p449 = scmp.eq.s32.totalorder %s27, 0
      %p450 = por %p448, %p449
      %p451 = scmp.ne.s32.totalorder %s443, %s445
      %p452 = scmp.eq.s32.totalorder %s32, 3
      %p453 = por %p451, %p452
      %p454 = scmp.ne.s32.totalorder %s445, %s446
      %p455 = scmp.eq.s32.totalorder %s32, 0
      %p456 = por %p454, %p455
      %p457 = scmp.ne.s32.totalorder %s445, %s446
      %p458 = scmp.eq.s32.totalorder %s33, 3
      %p459 = por %p457, %p458
      %p461 = scmp.ne.s32.totalorder %s446, %s460
      %p462 = scmp.eq.s32.totalorder %s33, 0
      %p463 = por %p461, %p462
      %s464 = ssub.s32 %s34, %s46
      %p465 = scmp.eq.s32.totalorder %s464, 0
      %s467 = sadd.s32 %s466, 1
      %s468 = scalar_select %p465, %s466, %s467
      %p471 = pneg %p465
      %p472 = scmp.eq.s32.totalorder %s27, 3
      %p473 = por %p471, %p472
      %p474 = scmp.ne.s32.totalorder %s466, %s469
      %p475 = scmp.eq.s32.totalorder %s27, 0
      %p476 = por %p474, %p475
      %p477 = scmp.ne.s32.totalorder %s466, %s469
      %p478 = scmp.eq.s32.totalorder %s32, 3
      %p479 = por %p477, %p478
      %p480 = scmp.ne.s32.totalorder %s469, %s470
      %p481 = scmp.eq.s32.totalorder %s32, 0
      %p482 = por %p480, %p481
      %p483 = scmp.ne.s32.totalorder %s469, %s470
      %p484 = scmp.eq.s32.totalorder %s33, 3
      %p485 = por %p483, %p484
      %p487 = scmp.ne.s32.totalorder %s470, %s486
      %p488 = scmp.eq.s32.totalorder %s33, 0
      %p489 = por %p487, %p488
      %p490 = scmp.le.s32.totalorder 1, %s27
      %p491 = scmp.lt.s32.totalorder %s27, 5
      %p492 = pnand %p490, %p491
      %p493 = pneg %p492
      // Predicated region
      $region9: #{tpu_custom_call.1} parent=5 // pred_check
        _
      $region10: #{tpu_custom_call.1} parent=5 // pred_check_branch
        %495 = sbr.rel (%p492) target = $region12
      $region11: #{tpu_custom_call.1} parent=5 // pred_region
        %s496 = ssub.s32 %s27, 1
        // Predicated region
        $region13: #{tpu_custom_call.1} parent=11 // pred_check
          %p497 = pneg %p86
        $region14: #{tpu_custom_call.1} parent=11 // pred_check_branch
          %499 = sbr.rel (%p497) target = $region16
        $region15: #{tpu_custom_call.1} parent=11 // pred_region
          _
        $region16: #{tpu_custom_call.1} parent=11 // pred_fallthru
          _
        // Predicated region
        $region17: #{tpu_custom_call.1} parent=11 // pred_check
          %p500 = pneg %p107
        $region18: #{tpu_custom_call.1} parent=11 // pred_check_branch
          %502 = sbr.rel (%p500) target = $region20
        $region19: #{tpu_custom_call.1} parent=11 // pred_region
          _
        $region20: #{tpu_custom_call.1} parent=11 // pred_fallthru
          _
        // Predicated region
        $region21: #{tpu_custom_call.1} parent=11 // pred_check
          %p503 = pneg %p128
        $region22: #{tpu_custom_call.1} parent=11 // pred_check_branch
          %505 = sbr.rel (%p503) target = $region24
        $region23: #{tpu_custom_call.1} parent=11 // pred_region
          _
        $region24: #{tpu_custom_call.1} parent=11 // pred_fallthru
          _
        // Predicated region
        $region25: #{tpu_custom_call.1} parent=11 // pred_check
          %p506 = pneg %p435
        $region26: #{tpu_custom_call.1} parent=11 // pred_check_branch
          %508 = sbr.rel (%p506) target = $region28
        $region27: #{tpu_custom_call.1} parent=11 // pred_region
          _
        $region28: #{tpu_custom_call.1} parent=11 // pred_fallthru
          _
        // Predicated region
        $region29: #{tpu_custom_call.1} parent=11 // pred_check
          %p509 = pneg %p456
        $region30: #{tpu_custom_call.1} parent=11 // pred_check_branch
          %511 = sbr.rel (%p509) target = $region32
        $region31: #{tpu_custom_call.1} parent=11 // pred_region
          _
        $region32: #{tpu_custom_call.1} parent=11 // pred_fallthru
          _
      $region12: #{tpu_custom_call.1} parent=5 // pred_fallthru
        _
      %p512 = scmp.lt.s32.totalorder %s27, 4
      // Predicated region
      $region33: #{tpu_custom_call.1} parent=5 // pred_check
        %p513 = pneg %p512
      $region34: #{tpu_custom_call.1} parent=5 // pred_check_branch
        %515 = sbr.rel (%p513) target = $region36
      $region35: #{tpu_custom_call.1} parent=5 // pred_region
        // Predicated region
        $region37: #{tpu_custom_call.1} parent=35 // pred_check
          %p516 = pneg %p59
        $region38: #{tpu_custom_call.1} parent=35 // pred_check_branch
          %518 = sbr.rel (%p516) target = $region40
        $region39: #{tpu_custom_call.1} parent=35 // pred_region
          %p519 = scmp.lt.s32.totalorder %s34, 1
          %s520 = scalar_select %p519, %s34, 1
          %s521 = smul.addr %s520, 8
          %s522 = scalar_lea.vmem %s0, %s521
        $region40: #{tpu_custom_call.1} parent=35 // pred_fallthru
          _
        // Predicated region
        $region41: #{tpu_custom_call.1} parent=35 // pred_check
          %p523 = pneg %p148
        $region42: #{tpu_custom_call.1} parent=35 // pred_check_branch
          %525 = sbr.rel (%p523) target = $region44
        $region43: #{tpu_custom_call.1} parent=35 // pred_region
          %p526 = scmp.lt.s32.totalorder %s35, 1
          %s527 = scalar_select %p526, %s35, 1
          %s528 = smul.addr %s527, 12
          %s529 = smul.addr %s528, 4
          %s530 = scalar_lea.vmem %s4, %s529
        $region44: #{tpu_custom_call.1} parent=35 // pred_fallthru
          _
        // Predicated region
        $region45: #{tpu_custom_call.1} parent=35 // pred_check
          %p531 = pneg %p174
        $region46: #{tpu_custom_call.1} parent=35 // pred_check_branch
          %533 = sbr.rel (%p531) target = $region48
        $region47: #{tpu_custom_call.1} parent=35 // pred_region
          %p534 = scmp.lt.s32.totalorder %s35, 1
          %s535 = scalar_select %p534, %s35, 1
          %s536 = smul.addr %s535, 16
          %s537 = smul.addr %s536, 4
          %s538 = scalar_lea.vmem %s5, %s537
        $region48: #{tpu_custom_call.1} parent=35 // pred_fallthru
          _
        // Predicated region
        $region49: #{tpu_custom_call.1} parent=35 // pred_check
          %p539 = pneg %p200
        $region50: #{tpu_custom_call.1} parent=35 // pred_check_branch
          %541 = sbr.rel (%p539) target = $region52
        $region51: #{tpu_custom_call.1} parent=35 // pred_region
          %p542 = scmp.lt.s32.totalorder %s35, 1
          %s543 = scalar_select %p542, %s35, 1
          %s544 = scalar_lea.vmem %s6, %s543
        $region52: #{tpu_custom_call.1} parent=35 // pred_fallthru
          _
        // Predicated region
        $region53: #{tpu_custom_call.1} parent=35 // pred_check
          %p545 = pneg %p226
        $region54: #{tpu_custom_call.1} parent=35 // pred_check_branch
          %547 = sbr.rel (%p545) target = $region56
        $region55: #{tpu_custom_call.1} parent=35 // pred_region
          %p548 = scmp.lt.s32.totalorder %s35, 1
          %s549 = scalar_select %p548, %s35, 1
          %s550 = scalar_lea.vmem %s7, %s549
        $region56: #{tpu_custom_call.1} parent=35 // pred_fallthru
          _
        // Predicated region
        $region57: #{tpu_custom_call.1} parent=35 // pred_check
          %p551 = pneg %p252
        $region58: #{tpu_custom_call.1} parent=35 // pred_check_branch
          %553 = sbr.rel (%p551) target = $region60
        $region59: #{tpu_custom_call.1} parent=35 // pred_region
          %p554 = scmp.lt.s32.totalorder %s35, 1
          %s555 = scalar_select %p554, %s35, 1
          %s556 = scalar_lea.vmem %s8, %s555
        $region60: #{tpu_custom_call.1} parent=35 // pred_fallthru
          _
        // Predicated region
        $region61: #{tpu_custom_call.1} parent=35 // pred_check
          %p557 = pneg %p278
        $region62: #{tpu_custom_call.1} parent=35 // pred_check_branch
          %559 = sbr.rel (%p557) target = $region64
        $region63: #{tpu_custom_call.1} parent=35 // pred_region
          %p560 = scmp.lt.s32.totalorder %s35, 1
          %s561 = scalar_select %p560, %s35, 1
          %s562 = smul.addr %s561, 4
          %s563 = smul.addr %s562, 4
          %s564 = scalar_lea.vmem %s9, %s563
        $region64: #{tpu_custom_call.1} parent=35 // pred_fallthru
          _
        // Predicated region
        $region65: #{tpu_custom_call.1} parent=35 // pred_check
          %p565 = pneg %p304
        $region66: #{tpu_custom_call.1} parent=35 // pred_check_branch
          %567 = sbr.rel (%p565) target = $region68
        $region67: #{tpu_custom_call.1} parent=35 // pred_region
          %p568 = scmp.lt.s32.totalorder %s35, 1
          %s569 = scalar_select %p568, %s35, 1
          %s570 = scalar_lea.vmem %s10, %s569
        $region68: #{tpu_custom_call.1} parent=35 // pred_fallthru
          _
        // Predicated region
        $region69: #{tpu_custom_call.1} parent=35 // pred_check
          %p571 = pneg %p330
        $region70: #{tpu_custom_call.1} parent=35 // pred_check_branch
          %573 = sbr.rel (%p571) target = $region72
        $region71: #{tpu_custom_call.1} parent=35 // pred_region
          %p574 = scmp.lt.s32.totalorder %s35, 1
          %s575 = scalar_select %p574, %s35, 1
          %s576 = smul.addr %s575, 16
          %s577 = smul.addr %s576, 4
          %s578 = scalar_lea.vmem %s11, %s577
        $region72: #{tpu_custom_call.1} parent=35 // pred_fallthru
          _
        // Predicated region
        $region73: #{tpu_custom_call.1} parent=35 // pred_check
          %p579 = pneg %p356
        $region74: #{tpu_custom_call.1} parent=35 // pred_check_branch
          %581 = sbr.rel (%p579) target = $region76
        $region75: #{tpu_custom_call.1} parent=35 // pred_region
          %p582 = scmp.lt.s32.totalorder %s35, 1
          %s583 = scalar_select %p582, %s35, 1
          %s584 = scalar_lea.vmem %s12, %s583
        $region76: #{tpu_custom_call.1} parent=35 // pred_fallthru
          _
        // Predicated region
        $region77: #{tpu_custom_call.1} parent=35 // pred_check
          %p585 = pneg %p382
        $region78: #{tpu_custom_call.1} parent=35 // pred_check_branch
          %587 = sbr.rel (%p585) target = $region80
        $region79: #{tpu_custom_call.1} parent=35 // pred_region
          %p588 = scmp.lt.s32.totalorder %s35, 1
          %s589 = scalar_select %p588, %s35, 1
          %s590 = scalar_lea.vmem %s13, %s589
        $region80: #{tpu_custom_call.1} parent=35 // pred_fallthru
          _
        // Predicated region
        $region81: #{tpu_custom_call.1} parent=35 // pred_check
          %p591 = pneg %p408
        $region82: #{tpu_custom_call.1} parent=35 // pred_check_branch
          %593 = sbr.rel (%p591) target = $region84
        $region83: #{tpu_custom_call.1} parent=35 // pred_region
          %p594 = scmp.lt.s32.totalorder %s35, 1
          %s595 = scalar_select %p594, %s35, 1
          %s596 = scalar_lea.vmem %s14, %s595
        $region84: #{tpu_custom_call.1} parent=35 // pred_fallthru
          _
      $region36: #{tpu_custom_call.1} parent=5 // pred_fallthru
        _
      %p597 = scmp.le.s32.totalorder 1, %s27
      %p598 = scmp.lt.s32.totalorder %s27, 5
      %p599 = pnand %p597, %p598
      %p600 = pneg %p599
      // Predicated region
      $region85: #{tpu_custom_call.1} parent=5 // pred_check
        _
      $region86: #{tpu_custom_call.1} parent=5 // pred_check_branch
        %602 = sbr.rel (%p599) target = $region88
      $region87: #{tpu_custom_call.1} parent=5 // pred_region
        %s603 = ssub.s32 %s27, 1
        %p604 = scmp.lt.s32.totalorder %s36, 1
        %s605 = scalar_select %p604, %s36, 1
        %s606 = smul.addr %s605, 8
        %s607 = scalar_lea.vmem %s0, %s606
        %p608 = pneg %p65
        %p609 = pneg %p62
        %p610 = pneg %p86
        %p611 = pneg %p83
        %p612 = pneg %p107
        %p613 = pneg %p104
        %p614 = pneg %p128
        %p615 = pneg %p125
        %p616 = scmp.lt.s32.totalorder %s37, 1
        %s617 = scalar_select %p616, %s37, 1
        %s618 = smul.addr %s617, 12
        %s619 = smul.addr %s618, 4
        %s620 = scalar_lea.vmem %s4, %s619
        %p621 = pneg %p154
        %p622 = pneg %p151
        %p623 = scmp.lt.s32.totalorder %s37, 1
        %s624 = scalar_select %p623, %s37, 1
        %s625 = smul.addr %s624, 16
        %s626 = smul.addr %s625, 4
        %s627 = scalar_lea.vmem %s5, %s626
        %p628 = pneg %p180
        %p629 = pneg %p177
        %p630 = scmp.lt.s32.totalorder %s37, 1
        %s631 = scalar_select %p630, %s37, 1
        %s632 = scalar_lea.vmem %s6, %s631
        %p633 = pneg %p206
        %p634 = pneg %p203
        %p635 = scmp.lt.s32.totalorder %s37, 1
        %s636 = scalar_select %p635, %s37, 1
        %s637 = scalar_lea.vmem %s7, %s636
        %p638 = pneg %p232
        %p639 = pneg %p229
        %p640 = scmp.lt.s32.totalorder %s37, 1
        %s641 = scalar_select %p640, %s37, 1
        %s642 = scalar_lea.vmem %s8, %s641
        %p643 = pneg %p258
        %p644 = pneg %p255
        %p645 = scmp.lt.s32.totalorder %s37, 1
        %s646 = scalar_select %p645, %s37, 1
        %s647 = smul.addr %s646, 4
        %s648 = smul.addr %s647, 4
        %s649 = scalar_lea.vmem %s9, %s648
        %p650 = pneg %p284
        %p651 = pneg %p281
        %p652 = scmp.lt.s32.totalorder %s37, 1
        %s653 = scalar_select %p652, %s37, 1
        %s654 = scalar_lea.vmem %s10, %s653
        %p655 = pneg %p310
        %p656 = pneg %p307
        %p657 = scmp.lt.s32.totalorder %s37, 1
        %s658 = scalar_select %p657, %s37, 1
        %s659 = smul.addr %s658, 16
        %s660 = smul.addr %s659, 4
        %s661 = scalar_lea.vmem %s11, %s660
        %p662 = pneg %p336
        %p663 = pneg %p333
        %p664 = scmp.lt.s32.totalorder %s37, 1
        %s665 = scalar_select %p664, %s37, 1
        %s666 = scalar_lea.vmem %s12, %s665
        %p667 = pneg %p362
        %p668 = pneg %p359
        %p669 = scmp.lt.s32.totalorder %s37, 1
        %s670 = scalar_select %p669, %s37, 1
        %s671 = scalar_lea.vmem %s13, %s670
        %p672 = pneg %p388
        %p673 = pneg %p385
        %p674 = scmp.lt.s32.totalorder %s37, 1
        %s675 = scalar_select %p674, %s37, 1
        %s676 = scalar_lea.vmem %s14, %s675
        %p677 = pneg %p414
        %p678 = pneg %p411
        %p679 = pneg %p435
        %p680 = pneg %p432
        %p681 = pneg %p456
        %p682 = pneg %p453
        %p683 = pneg %p482
        %p684 = pneg %p479
        %s685 = sand.u32 %s469, 1
        %s686 = scalar_lea.sflag [#allocation5], %s685
        %s687 = sand.u32 %s469, 1
        %s688 = scalar_lea.vmem [#allocation4], %s687
        %p689 = scmp.lt.s32.totalorder %s36, 1
        %s690 = scalar_select %p689, %s36, 1
        %s691 = smul.addr %s690, 8
        %s692 = scalar_lea.vmem %s0, %s691
        %p693 = scmp.lt.s32.totalorder %s37, 1
        %s694 = scalar_select %p693, %s37, 1
        %s695 = smul.addr %s694, 12
        %s696 = smul.addr %s695, 4
        %s697 = scalar_lea.vmem %s4, %s696
        %p698 = scmp.lt.s32.totalorder %s37, 1
        %s699 = scalar_select %p698, %s37, 1
        %s700 = smul.addr %s699, 16
        %s701 = smul.addr %s700, 4
        %s702 = scalar_lea.vmem %s5, %s701
        %p703 = scmp.lt.s32.totalorder %s37, 1
        %s704 = scalar_select %p703, %s37, 1
        %s705 = scalar_lea.vmem %s6, %s704
        %p706 = scmp.lt.s32.totalorder %s37, 1
        %s707 = scalar_select %p706, %s37, 1
        %s708 = scalar_lea.vmem %s7, %s707
        %p709 = scmp.lt.s32.totalorder %s37, 1
        %s710 = scalar_select %p709, %s37, 1
        %s711 = scalar_lea.vmem %s8, %s710
        %p712 = scmp.lt.s32.totalorder %s37, 1
        %s713 = scalar_select %p712, %s37, 1
        %s714 = smul.addr %s713, 4
        %s715 = smul.addr %s714, 4
        %s716 = scalar_lea.vmem %s9, %s715
        %p717 = scmp.lt.s32.totalorder %s37, 1
        %s718 = scalar_select %p717, %s37, 1
        %s719 = scalar_lea.vmem %s10, %s718
        %p720 = scmp.lt.s32.totalorder %s37, 1
        %s721 = scalar_select %p720, %s37, 1
        %s722 = smul.addr %s721, 16
        %s723 = smul.addr %s722, 4
        %s724 = scalar_lea.vmem %s11, %s723
        %p725 = scmp.lt.s32.totalorder %s37, 1
        %s726 = scalar_select %p725, %s37, 1
        %s727 = scalar_lea.vmem %s12, %s726
        %p728 = scmp.lt.s32.totalorder %s37, 1
        %s729 = scalar_select %p728, %s37, 1
        %s730 = scalar_lea.vmem %s13, %s729
        %p731 = scmp.lt.s32.totalorder %s37, 1
        %s732 = scalar_select %p731, %s37, 1
        %s733 = scalar_lea.vmem %s14, %s732
        %p735 = scmp.eq.s32.totalorder %s37, 0
        // Predicated region
        $region89: #{tpu_custom_call.1} parent=87 // pred_check
          %p736 = pneg %p735
        $region90: #{tpu_custom_call.1} parent=87 // pred_check_branch
          %738 = sbr.rel (%p736) target = $region92
        $region91: #{tpu_custom_call.1} parent=87 // pred_region
          %v739 = vld [vmem:[%s692] sm:$0xff]
          %v740 = vpack.c.bf16 %v739, %v739
          %v741 = vld [vmem:[%s1] sm:$0x3]
          %v742 = vld [vmem:[%s2] sm:$0x1]
          %v744 = vperm.slane %v742, 0
          %vm746 = vcmask 31744
          %v748 = vsel %vm746, %v740, 0
          %vm750 = vcmask 1041408
          %v752 = vsel %vm750, %v741, 0
          %754 = vmatpush.bf16.msra.mxu0 0
          %755 = vmatpush.bf16.msra.mxu0 0
          %756 = vmatpush.bf16.msra.mxu0 0
          %757 = vmatpush.bf16.msra.mxu0 0
          %758 = vmatpush.bf16.msra.mxu0 0
          %759 = vmatpush.bf16.msra.mxu0 0
          %760 = vmatpush.bf16.msra.mxu0 0
          %761 = vmatpush.bf16.msra.mxu0 %v752
          %762 = vmatmul.bf16.gmra.mxu0 %v748
          %v763 = vpop.f32.mrf.mxu0
          %v764 = vadd.f32 %v744, %v763
          %v765 = vpop.f32.mrf.mxu0
          %766 = vdwg.mxu0
          %v767 = vld [vmem:[%s3] sm:$0xff]
          %v768 = vadd.f32 %v764, %v767
          %vm769 = vcmask 261120
          %770 = vst.msk [vmem:[#allocation2] sm:$0xff] %vm769, %v768
        $region92: #{tpu_custom_call.1} parent=87 // pred_fallthru
          _
        %v771 = vld [vmem:[#allocation2] sm:$0xff]
        %v772 = vpack.c.bf16 %v771, %v771
        %v773 = vld [vmem:[%s697] sm:$0xff]
        %v774 = vld [vmem:[%s697 + $0x8] sm:$0xf]
        %v775 = vld [vmem:[%s697 + $0xc] sm:$0xff]
        %v776 = vld [vmem:[%s697 + $0x14] sm:$0xf]
        %v777 = vld [vmem:[%s697 + $0x18] sm:$0xff]
        %v778 = vld [vmem:[%s697 + $0x20] sm:$0xf]
        %v779 = vld [vmem:[%s697 + $0x24] sm:$0xff]
        %v780 = vld [vmem:[%s697 + $0x2c] sm:$0xf]
        %v789 = vunpack.c.l.b16 %v773
        %v790 = vunpack.c.h.b16 %v773
        %v791 = vunpack.c.l.b16 %v774
        %v792 = vunpack.c.l.b16 %v775
        %v793 = vunpack.c.h.b16 %v775
        %v794 = vunpack.c.l.b16 %v776
        %v795 = vunpack.c.l.b16 %v777
        %v796 = vunpack.c.h.b16 %v777
        %v797 = vunpack.c.l.b16 %v778
        %v798 = vunpack.c.l.b16 %v779
        %v799 = vunpack.c.h.b16 %v779
        %v800 = vunpack.c.l.b16 %v780
        %v801 = vpack.c.b16 %v792, %v789
        %v802 = vpack.c.b16 %v793, %v790
        %v803 = vpack.c.b16 %v794, %v791
        %v804 = vpack.c.b16 %v798, %v795
        %v805 = vpack.c.b16 %v799, %v796
        %v806 = vpack.c.b16 %v800, %v797
        %vm813 = vcmask 261120
        %v815 = vsel %vm813, %v772, 0
        %817 = vmatpush.bf16.msra.mxu0 0
        %818 = vmatpush.bf16.msra.mxu0 0
        %819 = vmatpush.bf16.msra.mxu0 0
        %820 = vmatpush.bf16.msra.mxu0 0
        %821 = vmatpush.bf16.msra.mxu0 0
        %822 = vmatpush.bf16.msra.mxu0 0
        %823 = vmatpush.bf16.msra.mxu0 %v804
        %824 = vmatpush.bf16.msra.mxu0 %v801
        %825 = vmatmul.bf16.gmra.mxu0 %v815
        %v826 = vpop.f32.mrf.mxu0
        %v827 = vadd.f32 0.0, %v826
        %v828 = vpop.f32.mrf.mxu0
        %829 = vdwg.mxu0
        %830 = vmatpush.bf16.msra.mxu0 0
        %831 = vmatpush.bf16.msra.mxu0 0
        %832 = vmatpush.bf16.msra.mxu0 0
        %833 = vmatpush.bf16.msra.mxu0 0
        %834 = vmatpush.bf16.msra.mxu0 0
        %835 = vmatpush.bf16.msra.mxu0 0
        %836 = vmatpush.bf16.msra.mxu0 %v805
        %837 = vmatpush.bf16.msra.mxu0 %v802
        %838 = vmatmul.bf16.gmra.mxu0 %v815
        %v839 = vpop.f32.mrf.mxu0
        %v840 = vadd.f32 0.0, %v839
        %v841 = vpop.f32.mrf.mxu0
        %842 = vdwg.mxu0
        %843 = vmatpush.bf16.msra.mxu0 0
        %844 = vmatpush.bf16.msra.mxu0 0
        %845 = vmatpush.bf16.msra.mxu0 0
        %846 = vmatpush.bf16.msra.mxu0 0
        %847 = vmatpush.bf16.msra.mxu0 0
        %848 = vmatpush.bf16.msra.mxu0 0
        %849 = vmatpush.bf16.msra.mxu0 %v806
        %850 = vmatpush.bf16.msra.mxu0 %v803
        %851 = vmatmul.bf16.gmra.mxu0 %v815
        %v852 = vpop.f32.mrf.mxu0
        %v853 = vadd.f32 0.0, %v852
        %v854 = vpop.f32.mrf.mxu0
        %855 = vdwg.mxu0
        %v856 = vpack.c.bf16 %v840, %v827
        %v857 = vpack.c.bf16 %v853, %v853
        %v859 = vrot.slane %v856, 4
        %v861 = vsel %vm813, %v856, 0
        %v864 = vsel %vm813, %v859, 0
        %866 = vmatpush.bf16.xpose.msra.mxu0 0
        %867 = vmatpush.bf16.xpose.msra.mxu0 0
        %868 = vmatpush.bf16.xpose.msra.mxu0 0
        %869 = vmatpush.bf16.xpose.msra.mxu0 0
        %870 = vmatpush.bf16.xpose.msra.mxu0 0
        %871 = vmatpush.bf16.xpose.msra.mxu0 0
        %872 = vmatpush.bf16.xpose.msra.mxu0 0
        %873 = vmatpush.bf16.xpose.msra.mxu0 %v864
        %874 = vmatmul.bf16.gmra.mxu0 %v861
        %v875 = vpop.f32.mrf.mxu0
        %v876 = vadd.f32 0.0, %v875
        %v877 = vpop.f32.mrf.mxu0
        %878 = vdwg.mxu0
        %vm879 = vcmask 64512
        %v880 = vsel %vm879, %v876, -inf
        %881 = vmax.xlane.f32.xlu0 %v880
        %v882 = vpop.xlane.xlu0 %881
        %v883 = vsub.f32 %v876, %v882
        %v884 = vmul.f32 %v883, 1.442695
        %v885 = vpow.pop %v884
        %v886 = vsel %vm879, %v885, 0.0
        %887 = vadd.xlane.f32.xlu0 %v886
        %v888 = vpop.xlane.xlu0 %887
        %v889 = vrcp.pop %v888
        %v890 = vmul.f32 %v885, %v889
        %v891 = vpack.c.bf16 %v890, %v890
        %v893 = vsel %vm879, %v891, 0
        %vm895 = vcmask 1043456
        %v897 = vsel %vm895, %v857, 0
        %899 = vmatpush.bf16.msra.mxu0 0
        %900 = vmatpush.bf16.msra.mxu0 0
        %901 = vmatpush.bf16.msra.mxu0 0
        %902 = vmatpush.bf16.msra.mxu0 0
        %903 = vmatpush.bf16.msra.mxu0 0
        %904 = vmatpush.bf16.msra.mxu0 0
        %905 = vmatpush.bf16.msra.mxu0 0
        %906 = vmatpush.bf16.msra.mxu0 %v897
        %907 = vmatmul.bf16.gmra.mxu0 %v893
        %v908 = vpop.f32.mrf.mxu0
        %v909 = vadd.f32 0.0, %v908
        %v910 = vpop.f32.mrf.mxu0
        %911 = vdwg.mxu0
        %912 = vrot.lane.b32.xlu0 %v856, 96
        %v913 = vpop.permute.xlu0 %912
        %v914 = vrot.slane %v913, 4
        %v915 = vunpack.c.l.b16 %v856
        %v916 = vpack.c.b16 %v915, %v915
        %917 = vrot.lane.b32.xlu0 %v916, 96
        %v918 = vpop.permute.xlu0 %917
        %v920 = vsel %vm813, %v918, 0
        %v923 = vsel %vm813, %v914, 0
        %925 = vmatpush.bf16.xpose.msra.mxu0 0
        %926 = vmatpush.bf16.xpose.msra.mxu0 0
        %927 = vmatpush.bf16.xpose.msra.mxu0 0
        %928 = vmatpush.bf16.xpose.msra.mxu0 0
        %929 = vmatpush.bf16.xpose.msra.mxu0 0
        %930 = vmatpush.bf16.xpose.msra.mxu0 0
        %931 = vmatpush.bf16.xpose.msra.mxu0 0
        %932 = vmatpush.bf16.xpose.msra.mxu0 %v923
        %933 = vmatmul.bf16.gmra.mxu0 %v920
        %v934 = vpop.f32.mrf.mxu0
        %v935 = vadd.f32 0.0, %v934
        %v936 = vpop.f32.mrf.mxu0
        %937 = vdwg.mxu0
        %v938 = vsel %vm879, %v935, -inf
        %939 = vmax.xlane.f32.xlu0 %v938
        %v940 = vpop.xlane.xlu0 %939
        %v941 = vsub.f32 %v935, %v940
        %v942 = vmul.f32 %v941, 1.442695
        %v943 = vpow.pop %v942
        %v944 = vsel %vm879, %v943, 0.0
        %945 = vadd.xlane.f32.xlu0 %v944
        %v946 = vpop.xlane.xlu0 %945
        %v947 = vrcp.pop %v946
        %v948 = vmul.f32 %v943, %v947
        %v949 = vpack.c.bf16 %v948, %v948
        %v951 = vunpack.c.l.b16 %v857
        %v952 = vpack.c.b16 %v951, %v951
        %953 = vrot.lane.b32.xlu0 %v952, 96
        %v954 = vpop.permute.xlu0 %953
        %v956 = vsel %vm879, %v949, 0
        %v959 = vsel %vm895, %v954, 0
        %961 = vmatpush.bf16.msra.mxu0 0
        %962 = vmatpush.bf16.msra.mxu0 0
        %963 = vmatpush.bf16.msra.mxu0 0
        %964 = vmatpush.bf16.msra.mxu0 0
        %965 = vmatpush.bf16.msra.mxu0 0
        %966 = vmatpush.bf16.msra.mxu0 0
        %967 = vmatpush.bf16.msra.mxu0 0
        %968 = vmatpush.bf16.msra.mxu0 %v959
        %969 = vmatmul.bf16.gmra.mxu0 %v956
        %v970 = vpop.f32.mrf.mxu0
        %v971 = vadd.f32 0.0, %v970
        %v972 = vpop.f32.mrf.mxu0
        %973 = vdwg.mxu0
        %974 = vrot.lane.b32.xlu0 %v856, 64
        %v975 = vpop.permute.xlu0 %974
        %v976 = vrot.slane %v975, 4
        %977 = vrot.lane.b32.xlu0 %v916, 64
        %v978 = vpop.permute.xlu0 %977
        %v980 = vsel %vm813, %v978, 0
        %v983 = vsel %vm813, %v976, 0
        %985 = vmatpush.bf16.xpose.msra.mxu0 0
        %986 = vmatpush.bf16.xpose.msra.mxu0 0
        %987 = vmatpush.bf16.xpose.msra.mxu0 0
        %988 = vmatpush.bf16.xpose.msra.mxu0 0
        %989 = vmatpush.bf16.xpose.msra.mxu0 0
        %990 = vmatpush.bf16.xpose.msra.mxu0 0
        %991 = vmatpush.bf16.xpose.msra.mxu0 0
        %992 = vmatpush.bf16.xpose.msra.mxu0 %v983
        %993 = vmatmul.bf16.gmra.mxu0 %v980
        %v994 = vpop.f32.mrf.mxu0
        %v995 = vadd.f32 0.0, %v994
        %v996 = vpop.f32.mrf.mxu0
        %997 = vdwg.mxu0
        %v998 = vsel %vm879, %v995, -inf
        %999 = vmax.xlane.f32.xlu0 %v998
        %v1000 = vpop.xlane.xlu0 %999
        %v1001 = vsub.f32 %v995, %v1000
        %v1002 = vmul.f32 %v1001, 1.442695
        %v1003 = vpow.pop %v1002
        %v1004 = vsel %vm879, %v1003, 0.0
        %1005 = vadd.xlane.f32.xlu0 %v1004
        %v1006 = vpop.xlane.xlu0 %1005
        %v1007 = vrcp.pop %v1006
        %v1008 = vmul.f32 %v1003, %v1007
        %v1009 = vpack.c.bf16 %v1008, %v1008
        %1010 = vrot.lane.b32.xlu0 %v952, 64
        %v1011 = vpop.permute.xlu0 %1010
        %v1013 = vsel %vm879, %v1009, 0
        %v1016 = vsel %vm895, %v1011, 0
        %1018 = vmatpush.bf16.msra.mxu0 0
        %1019 = vmatpush.bf16.msra.mxu0 0
        %1020 = vmatpush.bf16.msra.mxu0 0
        %1021 = vmatpush.bf16.msra.mxu0 0
        %1022 = vmatpush.bf16.msra.mxu0 0
        %1023 = vmatpush.bf16.msra.mxu0 0
        %1024 = vmatpush.bf16.msra.mxu0 0
        %1025 = vmatpush.bf16.msra.mxu0 %v1016
        %1026 = vmatmul.bf16.gmra.mxu0 %v1013
        %v1027 = vpop.f32.mrf.mxu0
        %v1028 = vadd.f32 0.0, %v1027
        %v1029 = vpop.f32.mrf.mxu0
        %1030 = vdwg.mxu0
        %1031 = vrot.lane.b32.xlu0 %v856, 32
        %v1032 = vpop.permute.xlu0 %1031
        %v1033 = vrot.slane %v1032, 4
        %1034 = vrot.lane.b32.xlu0 %v916, 32
        %v1035 = vpop.permute.xlu0 %1034
        %v1037 = vsel %vm813, %v1035, 0
        %v1040 = vsel %vm813, %v1033, 0
        %1042 = vmatpush.bf16.xpose.msra.mxu0 0
        %1043 = vmatpush.bf16.xpose.msra.mxu0 0
        %1044 = vmatpush.bf16.xpose.msra.mxu0 0
        %1045 = vmatpush.bf16.xpose.msra.mxu0 0
        %1046 = vmatpush.bf16.xpose.msra.mxu0 0
        %1047 = vmatpush.bf16.xpose.msra.mxu0 0
        %1048 = vmatpush.bf16.xpose.msra.mxu0 0
        %1049 = vmatpush.bf16.xpose.msra.mxu0 %v1040
        %1050 = vmatmul.bf16.gmra.mxu0 %v1037
        %v1051 = vpop.f32.mrf.mxu0
        %v1052 = vadd.f32 0.0, %v1051
        %v1053 = vpop.f32.mrf.mxu0
        %1054 = vdwg.mxu0
        %v1055 = vsel %vm879, %v1052, -inf
        %1056 = vmax.xlane.f32.xlu0 %v1055
        %v1057 = vpop.xlane.xlu0 %1056
        %v1058 = vsub.f32 %v1052, %v1057
        %v1059 = vmul.f32 %v1058, 1.442695
        %v1060 = vpow.pop %v1059
        %v1061 = vsel %vm879, %v1060, 0.0
        %1062 = vadd.xlane.f32.xlu0 %v1061
        %v1063 = vpop.xlane.xlu0 %1062
        %v1064 = vrcp.pop %v1063
        %v1065 = vmul.f32 %v1060, %v1064
        %v1066 = vpack.c.bf16 %v1065, %v1065
        %1067 = vrot.lane.b32.xlu0 %v952, 32
        %v1068 = vpop.permute.xlu0 %1067
        %v1070 = vsel %vm879, %v1066, 0
        %v1073 = vsel %vm895, %v1068, 0
        %1075 = vmatpush.bf16.msra.mxu0 0
        %1076 = vmatpush.bf16.msra.mxu0 0
        %1077 = vmatpush.bf16.msra.mxu0 0
        %1078 = vmatpush.bf16.msra.mxu0 0
        %1079 = vmatpush.bf16.msra.mxu0 0
        %1080 = vmatpush.bf16.msra.mxu0 0
        %1081 = vmatpush.bf16.msra.mxu0 0
        %1082 = vmatpush.bf16.msra.mxu0 %v1073
        %1083 = vmatmul.bf16.gmra.mxu0 %v1070
        %v1084 = vpop.f32.mrf.mxu0
        %v1085 = vadd.f32 0.0, %v1084
        %v1086 = vpop.f32.mrf.mxu0
        %1087 = vdwg.mxu0
        %1089 = vrot.lane.b32.xlu0 %v971, 32
        %v1090 = vpop.permute.xlu0 %1089
        %1093 = vrot.lane.b32.xlu0 %v1028, 64
        %v1094 = vpop.permute.xlu0 %1093
        %1097 = vrot.lane.b32.xlu0 %v1085, 96
        %v1098 = vpop.permute.xlu0 %1097
        %v1100 = vsel %vm813, %v909, %v1090
        %vm1101 = vcmask 523264
        %v1102 = vsel %vm1101, %v1100, %v1094
        %vm1103 = vcmask 785408
        %v1104 = vsel %vm1103, %v1102, %v1098
        %v1105 = vpack.c.bf16 %v1104, %v1104
        %v1106 = vld [vmem:[%s702] sm:$0xf]
        %v1107 = vld [vmem:[%s702 + $0x4] sm:$0xf]
        %v1108 = vld [vmem:[%s702 + $0x8] sm:$0xf]
        %v1109 = vld [vmem:[%s702 + $0xc] sm:$0xf]
        %v1110 = vld [vmem:[%s702 + $0x10] sm:$0xf]
        %v1111 = vld [vmem:[%s702 + $0x14] sm:$0xf]
        %v1112 = vld [vmem:[%s702 + $0x18] sm:$0xf]
        %v1113 = vld [vmem:[%s702 + $0x1c] sm:$0xf]
        %v1114 = vld [vmem:[%s702 + $0x20] sm:$0xf]
        %v1115 = vld [vmem:[%s702 + $0x24] sm:$0xf]
        %v1116 = vld [vmem:[%s702 + $0x28] sm:$0xf]
        %v1117 = vld [vmem:[%s702 + $0x2c] sm:$0xf]
        %v1118 = vld [vmem:[%s702 + $0x30] sm:$0xf]
        %v1119 = vld [vmem:[%s702 + $0x34] sm:$0xf]
        %v1120 = vld [vmem:[%s702 + $0x38] sm:$0xf]
        %v1121 = vld [vmem:[%s702 + $0x3c] sm:$0xf]
        %v1122 = vld [vmem:[%s705] sm:$0x1]
        %v1124 = vperm.slane %v1122, 0
        %v1142 = vunpack.c.l.b16 %v1106
        %v1143 = vunpack.c.l.b16 %v1107
        %v1144 = vunpack.c.l.b16 %v1108
        %v1145 = vunpack.c.l.b16 %v1109
        %v1146 = vunpack.c.l.b16 %v1110
        %v1147 = vunpack.c.l.b16 %v1111
        %v1148 = vunpack.c.l.b16 %v1112
        %v1149 = vunpack.c.l.b16 %v1113
        %v1150 = vunpack.c.l.b16 %v1114
        %v1151 = vunpack.c.l.b16 %v1115
        %v1152 = vunpack.c.l.b16 %v1116
        %v1153 = vunpack.c.l.b16 %v1117
        %v1154 = vunpack.c.l.b16 %v1118
        %v1155 = vunpack.c.l.b16 %v1119
        %v1156 = vunpack.c.l.b16 %v1120
        %v1157 = vunpack.c.l.b16 %v1121
        %v1158 = vpack.c.b16 %v1143, %v1142
        %v1159 = vpack.c.b16 %v1145, %v1144
        %v1160 = vpack.c.b16 %v1147, %v1146
        %v1161 = vpack.c.b16 %v1149, %v1148
        %v1162 = vpack.c.b16 %v1151, %v1150
        %v1163 = vpack.c.b16 %v1153, %v1152
        %v1164 = vpack.c.b16 %v1155, %v1154
        %v1165 = vpack.c.b16 %v1157, %v1156
        %1174 = vmatpush.bf16.msra.mxu0 %v1165
        %1175 = vmatpush.bf16.msra.mxu0 %v1164
        %1176 = vmatpush.bf16.msra.mxu0 %v1163
        %1177 = vmatpush.bf16.msra.mxu0 %v1162
        %1178 = vmatpush.bf16.msra.mxu0 %v1161
        %1179 = vmatpush.bf16.msra.mxu0 %v1160
        %1180 = vmatpush.bf16.msra.mxu0 %v1159
        %1181 = vmatpush.bf16.msra.mxu0 %v1158
        %1182 = vmatmul.bf16.gmra.mxu0 %v1105
        %v1183 = vpop.f32.mrf.mxu0
        %v1184 = vadd.f32 %v1124, %v1183
        %v1185 = vpop.f32.mrf.mxu0
        %1186 = vdwg.mxu0
        %v1187 = vadd.f32 %v1184, %v771
        %v1188 = vld [vmem:[%s708] sm:$0x1]
        %v1189 = vld [vmem:[%s711] sm:$0x1]
        %v1190 = vsel %vm813, %v1187, 0.0
        %1191 = vadd.xlane.f32.xlu0 %v1190
        %v1192 = vpop.xlane.xlu0 %1191
        %v1193 = vrcp.pop 32.0
        %v1194 = vmul.f32 32.0, %v1193
        %v1195 = vsub.f32 1.0, %v1194
        %v1196 = vmul.f32 %v1193, %v1195
        %v1197 = vadd.f32 %v1193, %v1196
        %vm1198 = vweird.f32 %v1193
        %v1199 = vsel %vm1198, %v1193, %v1197
        %v1200 = vmul.f32 %v1192, %v1199
        %v1201 = vsub.f32 %v1187, %v1200
        %v1202 = vmul.f32 %v1201, %v1201
        %v1203 = vsel %vm813, %v1202, 0.0
        %1204 = vadd.xlane.f32.xlu0 %v1203
        %v1205 = vpop.xlane.xlu0 %1204
        %v1206 = vmul.f32 %v1205, %v1199
        %v1207 = vadd.f32 %v1206, 1e-05
        %v1208 = vrsqrt.pop %v1207
        %v1209 = vmul.f32 %v1208, %v1207
        %v1210 = vmul.f32 %v1209, %v1208
        %v1211 = vmul.f32 0.5, %v1210
        %v1212 = vsub.f32 1.5, %v1211
        %v1213 = vmul.f32 %v1208, %v1212
        %vm1214 = vweird.f32 %v1207
        %vm1215 = vweird.f32 %v1208
        %vm1216 = vmor %vm1214, %vm1215
        %v1217 = vsel %vm1216, %v1208, %v1213
        %v1218 = vmul.f32 %v1201, %v1217
        %v1220 = vperm.slane %v1188, 0
        %v1222 = vmul.f32 %v1218, %v1220
        %v1224 = vperm.slane %v1189, 0
        %v1226 = vadd.f32 %v1222, %v1224
        %v1227 = vpack.c.bf16 %v1226, %v1226
        %v1228 = vld [vmem:[%s716] sm:$0xf]
        %v1229 = vld [vmem:[%s716 + $0x4] sm:$0xf]
        %v1230 = vld [vmem:[%s716 + $0x8] sm:$0xf]
        %v1231 = vld [vmem:[%s716 + $0xc] sm:$0xf]
        %v1232 = vld [vmem:[%s719] sm:$0x1]
        %v1234 = vperm.slane %v1232, 0
        %v1240 = vunpack.c.l.b16 %v1228
        %v1241 = vunpack.c.l.b16 %v1229
        %v1242 = vunpack.c.l.b16 %v1230
        %v1243 = vunpack.c.l.b16 %v1231
        %v1244 = vpack.c.b16 %v1241, %v1240
        %v1245 = vpack.c.b16 %v1243, %v1242
        %v1249 = vsel %vm813, %v1227, 0
        %1251 = vmatpush.bf16.msra.mxu0 0
        %1252 = vmatpush.bf16.msra.mxu0 0
        %1253 = vmatpush.bf16.msra.mxu0 0
        %1254 = vmatpush.bf16.msra.mxu0 0
        %1255 = vmatpush.bf16.msra.mxu0 0
        %1256 = vmatpush.bf16.msra.mxu0 0
        %1257 = vmatpush.bf16.msra.mxu0 %v1245
        %1258 = vmatpush.bf16.msra.mxu0 %v1244
        %1259 = vmatmul.bf16.gmra.mxu0 %v1249
        %v1260 = vpop.f32.mrf.mxu0
        %v1261 = vadd.f32 %v1234, %v1260
        %v1262 = vpop.f32.mrf.mxu0
        %1263 = vdwg.mxu0
        %v1264 = vmax.f32 %v1261, 0.0
        %v1265 = vpack.c.bf16 %v1264, %v1264
        %v1266 = vld [vmem:[%s724] sm:$0xf]
        %v1267 = vld [vmem:[%s724 + $0x4] sm:$0xf]
        %v1268 = vld [vmem:[%s724 + $0x8] sm:$0xf]
        %v1269 = vld [vmem:[%s724 + $0xc] sm:$0xf]
        %v1270 = vld [vmem:[%s724 + $0x10] sm:$0xf]
        %v1271 = vld [vmem:[%s724 + $0x14] sm:$0xf]
        %v1272 = vld [vmem:[%s724 + $0x18] sm:$0xf]
        %v1273 = vld [vmem:[%s724 + $0x1c] sm:$0xf]
        %v1274 = vld [vmem:[%s724 + $0x20] sm:$0xf]
        %v1275 = vld [vmem:[%s724 + $0x24] sm:$0xf]
        %v1276 = vld [vmem:[%s724 + $0x28] sm:$0xf]
        %v1277 = vld [vmem:[%s724 + $0x2c] sm:$0xf]
        %v1278 = vld [vmem:[%s724 + $0x30] sm:$0xf]
        %v1279 = vld [vmem:[%s724 + $0x34] sm:$0xf]
        %v1280 = vld [vmem:[%s724 + $0x38] sm:$0xf]
        %v1281 = vld [vmem:[%s724 + $0x3c] sm:$0xf]
        %v1282 = vld [vmem:[%s727] sm:$0x1]
        %v1284 = vperm.slane %v1282, 0
        %v1302 = vunpack.c.l.b16 %v1266
        %v1303 = vunpack.c.l.b16 %v1267
        %v1304 = vunpack.c.l.b16 %v1268
        %v1305 = vunpack.c.l.b16 %v1269
        %v1306 = vunpack.c.l.b16 %v1270
        %v1307 = vunpack.c.l.b16 %v1271
        %v1308 = vunpack.c.l.b16 %v1272
        %v1309 = vunpack.c.l.b16 %v1273
        %v1310 = vunpack.c.l.b16 %v1274
        %v1311 = vunpack.c.l.b16 %v1275
        %v1312 = vunpack.c.l.b16 %v1276
        %v1313 = vunpack.c.l.b16 %v1277
        %v1314 = vunpack.c.l.b16 %v1278
        %v1315 = vunpack.c.l.b16 %v1279
        %v1316 = vunpack.c.l.b16 %v1280
        %v1317 = vunpack.c.l.b16 %v1281
        %v1318 = vpack.c.b16 %v1303, %v1302
        %v1319 = vpack.c.b16 %v1305, %v1304
        %v1320 = vpack.c.b16 %v1307, %v1306
        %v1321 = vpack.c.b16 %v1309, %v1308
        %v1322 = vpack.c.b16 %v1311, %v1310
        %v1323 = vpack.c.b16 %v1313, %v1312
        %v1324 = vpack.c.b16 %v1315, %v1314
        %v1325 = vpack.c.b16 %v1317, %v1316
        %1334 = vmatpush.bf16.msra.mxu0 %v1325
        %1335 = vmatpush.bf16.msra.mxu0 %v1324
        %1336 = vmatpush.bf16.msra.mxu0 %v1323
        %1337 = vmatpush.bf16.msra.mxu0 %v1322
        %1338 = vmatpush.bf16.msra.mxu0 %v1321
        %1339 = vmatpush.bf16.msra.mxu0 %v1320
        %1340 = vmatpush.bf16.msra.mxu0 %v1319
        %1341 = vmatpush.bf16.msra.mxu0 %v1318
        %1342 = vmatmul.bf16.gmra.mxu0 %v1265
        %v1343 = vpop.f32.mrf.mxu0
        %v1344 = vadd.f32 %v1284, %v1343
        %v1345 = vpop.f32.mrf.mxu0
        %1346 = vdwg.mxu0
        %v1347 = vadd.f32 %v1344, %v1226
        %v1348 = vld [vmem:[%s730] sm:$0x1]
        %v1349 = vld [vmem:[%s733] sm:$0x1]
        %v1350 = vsel %vm813, %v1347, 0.0
        %1351 = vadd.xlane.f32.xlu0 %v1350
        %v1352 = vpop.xlane.xlu0 %1351
        %v1353 = vmul.f32 %v1352, %v1199
        %v1354 = vsub.f32 %v1347, %v1353
        %v1355 = vmul.f32 %v1354, %v1354
        %v1356 = vsel %vm813, %v1355, 0.0
        %1357 = vadd.xlane.f32.xlu0 %v1356
        %v1358 = vpop.xlane.xlu0 %1357
        %v1359 = vmul.f32 %v1358, %v1199
        %v1360 = vadd.f32 %v1359, 1e-05
        %v1361 = vrsqrt.pop %v1360
        %v1362 = vmul.f32 %v1361, %v1360
        %v1363 = vmul.f32 %v1362, %v1361
        %v1364 = vmul.f32 0.5, %v1363
        %v1365 = vsub.f32 1.5, %v1364
        %v1366 = vmul.f32 %v1361, %v1365
        %vm1367 = vweird.f32 %v1360
        %vm1368 = vweird.f32 %v1361
        %vm1369 = vmor %vm1367, %vm1368
        %v1370 = vsel %vm1369, %v1361, %v1366
        %v1371 = vmul.f32 %v1354, %v1370
        %v1373 = vperm.slane %v1348, 0
        %v1375 = vmul.f32 %v1371, %v1373
        %v1377 = vperm.slane %v1349, 0
        %v1379 = vadd.f32 %v1375, %v1377
        %1380 = vst.msk [vmem:[#allocation2] sm:$0xff] %vm813, %v1379
        %p1381 = scmp.eq.s32.totalorder %s37, 1
        // Predicated region
        $region93: #{tpu_custom_call.1} parent=87 // pred_check
          %p1382 = pneg %p1381
        $region94: #{tpu_custom_call.1} parent=87 // pred_check_branch
          %1384 = sbr.rel (%p1382) target = $region96
        $region95: #{tpu_custom_call.1} parent=87 // pred_region
          %v1385 = vld [vmem:[%s15] sm:$0x1]
          %v1387 = vperm.slane %v1385, 0
          %v1389 = vmul.f32 %v1379, %v1387
          %v1390 = vsel %vm813, %v1389, 0.0
          %1391 = vadd.xlane.f32.xlu0 %v1390
          %v1392 = vpop.xlane.xlu0 %1391
          %s1393 = sld [smem:[#allocation3]]
          %v1394 = vstv %s1393
          %v1395 = vadd.f32 %v1392, %v1394
          %v1396 = vxor.u32 %v1395, 2147483648
          %v1397 = vmul.f32 %v1396, 1.442695
          %v1398 = vpow.pop %v1397
          %v1399 = vadd.f32 %v1398, 1.0
          %v1400 = vrcp.pop %v1399
          %v1401 = vmul.f32 %v1399, %v1400
          %v1402 = vsub.f32 1.0, %v1401
          %v1403 = vmul.f32 %v1400, %v1402
          %v1404 = vadd.f32 %v1400, %v1403
          %vm1405 = vweird.f32 %v1399
          %vm1406 = vweird.f32 %v1400
          %vm1407 = vmor %vm1405, %vm1406
          %v1408 = vsel %vm1407, %v1400, %v1404
          %v1409 = vand.u32 2147483647, %v1399
          %vm1410 = vcmp.eq.f32.partialorder %v1409, 8.507059e+37
          %v1411 = vand.u32 %v1399, 2147483648
          %v1412 = vor.u32 1.1754944e-38, %v1411
          %v1413 = vsel %vm1410, %v1412, %v1408
          %v1414 = vmul.f32 1.0, %v1413
          %v1416 = vlaneseq
          %v1417 = vand.u32 %v1416, 127
          %v1418 = vperm.slane %v1414, %v1417
          %vm1420 = vcmask 57344
          %1421 = vst.msk [vmem:[%s688] sm:$0x1] %vm1420, %v1418
        $region96: #{tpu_custom_call.1} parent=87 // pred_fallthru
          _
        %s1422 = sand.u32 %s469, 1
        %s1423 = scalar_lea.sflag [#allocation5], %s1422
        %s1424 = sand.u32 %s469, 1
        %s1425 = scalar_lea.vmem [#allocation4], %s1424
        // Predicated region
        $region97: #{tpu_custom_call.1} parent=87 // pred_check
          %p1426 = pneg %p479
        $region98: #{tpu_custom_call.1} parent=87 // pred_check_branch
          %1428 = sbr.rel (%p1426) target = $region100
        $region99: #{tpu_custom_call.1} parent=87 // pred_region
          %1430 = vsyncadd %s1423, 0
          %s1431 = scalar_lea.hbm %s17, %s36
          %s1433 = sshll.u32 %s1425, 4
          %s1434 = int_to_ptr.vmem [resolvable:$true] %s1433
          %s1435 = sshll.u32 %s1431, 4
          %s1436 = int_to_ptr.hbm [resolvable:$true] %s1435
          %1438 = dma.vmem_to_hbm [thread:$0]  %s1434, 16, %s1436, %s1423
        $region100: #{tpu_custom_call.1} parent=87 // pred_fallthru
          _
      $region88: #{tpu_custom_call.1} parent=5 // pred_fallthru
        _
      %p1439 = scmp.le.s32.totalorder 2, %s27
      // Predicated region
      $region101: #{tpu_custom_call.1} parent=5 // pred_check
        %p1440 = pneg %p1439
      $region102: #{tpu_custom_call.1} parent=5 // pred_check_branch
        %1442 = sbr.rel (%p1440) target = $region104
      $region103: #{tpu_custom_call.1} parent=5 // pred_region
        %s1443 = ssub.s32 %s27, 2
        // Predicated region
        $region105: #{tpu_custom_call.1} parent=103 // pred_check
          %p1444 = pneg %p485
        $region106: #{tpu_custom_call.1} parent=103 // pred_check_branch
          %1446 = sbr.rel (%p1444) target = $region108
        $region107: #{tpu_custom_call.1} parent=103 // pred_region
          %s1447 = sand.u32 %s470, 1
          %s1448 = scalar_lea.sflag [#allocation5], %s1447
          %s1449 = sand.u32 %s470, 1
          %s1450 = scalar_lea.vmem [#allocation4], %s1449
          %1452 = dma.done %s1448, 16
        $region108: #{tpu_custom_call.1} parent=103 // pred_fallthru
          _
      $region104: #{tpu_custom_call.1} parent=5 // pred_fallthru
        _
    $region6: #{tpu_custom_call.1} parent=1 // loop_footer
      %s31 = sadd.s32 1, %s27
    $region7: #{tpu_custom_call.1} parent=1 // loop_footer_branch
      %26 = sbr.rel target = $region3
    $region8: #{tpu_custom_call.1} parent=1 // loop_exit
      _
    %1453 = vsyncpa [#allocation5], 1
    %s1454 = scalar_lea.sflag [#allocation5], 1
    %1455 = vsyncpa %s1454, 1

</llo_original>
